<compile_context>
chip_gen: v7x
topology: tpu7x:2x2x1
jax: 0.10.0
libtpu: 0.0.40
codegen_flags: <defaults>
</compile_context>

<pallas_src>
import functools
import math

import jax
import jax.numpy as jnp
from jax import lax
from jax.experimental import pallas as pl
from jax.experimental.pallas import tpu as pltpu


def _round_up(x, m):
    return ((x + m - 1) // m) * m


# ----------------------------------------------------------------------------
# Fused kernel: input_proj (1x1 conv) + cross-attention stub + GroupWiseLinear
# ----------------------------------------------------------------------------
def _q2l_fused_kernel(src_ref, pos_ref, pw_ref, pb_ref, q_ref, fcw_ref, fcb_ref,
                      out_ref, *, scale):
    # src_ref: (1, Cin, HW) bf16   (NCHW layout, flattened spatially)
    # pos_ref: (HW, Dp)     f32
    # pw_ref : (Cin, Dp)    bf16   pb_ref: (1, Dp) f32
    # q_ref  : (Cp, Dp)     f32
    # fcw_ref: (Cp, Dp)     f32    fcb_ref: (1, Cp) f32
    # out_ref: (1, 1, Cp)   f32

    # 1x1 conv consumed directly in NCHW layout:
    #   mem[hw, d] = sum_c src[c, hw] * w[c, d] + b[d] + pos[hw, d]
    x = src_ref[0]                                           # (Cin, HW) bf16
    proj = lax.dot_general(
        x, pw_ref[...], (((0,), (0,)), ((), ())),            # contract Cin
        preferred_element_type=jnp.float32)                  # (HW, Dp) f32
    mem_f32 = proj + pb_ref[...] + pos_ref[...]              # (HW, Dp) f32
    mem = mem_f32.astype(jnp.bfloat16)

    q_f32 = q_ref[...]                                       # (Cp, Dp) f32
    q = q_f32.astype(jnp.bfloat16)

    # Cross-attention (queries attend to memory).  trans_b contraction: no
    # explicit (Dp, HW) transpose is materialized.
    scores = lax.dot_general(
        q, mem, (((1,), (1,)), ((), ())),
        preferred_element_type=jnp.float32) * scale          # (Cp, HW) f32
    m = jnp.max(scores, axis=-1, keepdims=True)
    p = jnp.exp(scores - m)
    denom = jnp.sum(p, axis=-1, keepdims=True)
    attn = p * pl.reciprocal(denom, approx=True)             # EUP vrcp slot

    ctx = jnp.dot(attn.astype(jnp.bfloat16), mem,
                  preferred_element_type=jnp.float32)        # (Cp, Dp) f32
    hs = q_f32 + ctx                                         # residual, f32

    # GroupWiseLinear epilogue: out[c] = sum_d W[c, d] * hs[c, d] + b[c]
    logits = jnp.sum(fcw_ref[...] * hs, axis=-1)             # (Cp,)
    out_ref[...] = (logits[None, :] + fcb_ref[...])[None]    # (1, 1, Cp)


# ----------------------------------------------------------------------------
# Backbone stand-in: identity features + sinusoidal positional encoding.
# Pos is batch-invariant, produced already flattened as (HW, D) channels-last.
# ----------------------------------------------------------------------------
def _sine_pos_encoding(H, W, D):
    assert D % 4 == 0, "hidden_dim must be divisible by 4 for 2D sin/cos pos enc"
    d_half = D // 2
    ys = jnp.arange(H, dtype=jnp.float32)[:, None]
    xs = jnp.arange(W, dtype=jnp.float32)[:, None]
    dim_t = jnp.arange(d_half // 2, dtype=jnp.float32)[None, :]
    freq = 1.0 / (10000.0 ** (2.0 * dim_t / d_half))
    pos_y = jnp.concatenate([jnp.sin(ys * freq), jnp.cos(ys * freq)], axis=-1)
    pos_x = jnp.concatenate([jnp.sin(xs * freq), jnp.cos(xs * freq)], axis=-1)
    pos_y = jnp.broadcast_to(pos_y[:, None, :], (H, W, d_half))
    pos_x = jnp.broadcast_to(pos_x[None, :, :], (H, W, d_half))
    pos = jnp.concatenate([pos_y, pos_x], axis=-1)            # (H, W, D)
    return pos.reshape(H * W, D)


# ----------------------------------------------------------------------------
# Qeruy2Label forward (matches the PyTorch module's forward semantics)
# ----------------------------------------------------------------------------
def query2label_forward(x_nchw, params):
    proj_w = params["proj_w"]            # (Cin, D)
    proj_b = params["proj_b"]            # (1, D)
    query_embed = params["query_embed"]  # (C, D)
    fc_w = params["fc_w"]                # (C, D)
    fc_b = params["fc_b"]                # (1, C)

    Cin, D = proj_w.shape
    C = query_embed.shape[0]
    B, _, H, W = x_nchw.shape
    HW = H * W

    # Backbone stub (identity features).  Pure reshape, no HBM transpose:
    src_flat = x_nchw.reshape(B, Cin, HW).astype(jnp.bfloat16)   # (B, Cin, HW)
    pos_flat = _sine_pos_encoding(H, W, D)                       # (HW, D) f32

    # Lane-dense padding of hidden / class dims (zeros are exact no-ops).
    Dp = _round_up(D, 128)
    Cp = _round_up(C, 128)
    pw = jnp.pad(proj_w, ((0, 0), (0, Dp - D))).astype(jnp.bfloat16)
    pb = jnp.pad(proj_b, ((0, 0), (0, Dp - D)))
    pos_p = jnp.pad(pos_flat, ((0, 0), (0, Dp - D)))
    q_p = jnp.pad(query_embed, ((0, Cp - C), (0, Dp - D)))
    fcw_p = jnp.pad(fc_w, ((0, Cp - C), (0, Dp - D)))
    fcb_p = jnp.pad(fc_b, ((0, 0), (0, Cp - C)))

    kernel = functools.partial(_q2l_fused_kernel,
                               scale=1.0 / math.sqrt(float(D)))

    out_padded = pl.pallas_call(
        kernel,
        out_shape=jax.ShapeDtypeStruct((B, 1, Cp), jnp.float32),
        grid_spec=pltpu.PrefetchScalarGridSpec(
            num_scalar_prefetch=0,
            grid=(B,),
            in_specs=[
                pl.BlockSpec((1, Cin, HW), lambda b: (b, 0, 0)),   # src (NCHW)
                pl.BlockSpec((HW, Dp), lambda b: (0, 0)),          # pos
                pl.BlockSpec((Cin, Dp), lambda b: (0, 0)),         # proj_w
                pl.BlockSpec((1, Dp), lambda b: (0, 0)),           # proj_b
                pl.BlockSpec((Cp, Dp), lambda b: (0, 0)),          # query_embed
                pl.BlockSpec((Cp, Dp), lambda b: (0, 0)),          # fc_w
                pl.BlockSpec((1, Cp), lambda b: (0, 0)),           # fc_b
            ],
            out_specs=pl.BlockSpec((1, 1, Cp), lambda b: (b, 0, 0)),
        ),
        compiler_params=pltpu.CompilerParams(
            dimension_semantics=("parallel",),
            vmem_limit_bytes=32 * 1024 * 1024,
        ),
    )(src_flat, pos_p, pw, pb, q_p, fcw_p, fcb_p)

    return out_padded.reshape(B, Cp)[:, :C]                      # (B, num_class)


def init_params(key, num_channels, hidden_dim, num_class):
    k1, k2, k3, k4, k5 = jax.random.split(key, 5)
    # Conv2d(num_channels, hidden_dim, 1): kaiming-uniform-ish bounds
    bound_w = 1.0 / math.sqrt(num_channels)
    proj_w = jax.random.uniform(k1, (num_channels, hidden_dim), jnp.float32,
                                -bound_w, bound_w)
    proj_b = jax.random.uniform(k2, (1, hidden_dim), jnp.float32, -bound_w, bound_w)
    # nn.Embedding(num_class, hidden_dim): N(0, 1)
    query_embed = jax.random.normal(k3, (num_class, hidden_dim), jnp.float32)
    # GroupWiseLinear: uniform(-stdv, stdv), stdv = 1/sqrt(hidden_dim)
    stdv = 1.0 / math.sqrt(hidden_dim)
    fc_w = jax.random.uniform(k4, (num_class, hidden_dim), jnp.float32, -stdv, stdv)
    fc_b = jax.random.uniform(k5, (1, num_class), jnp.float32, -stdv, stdv)
    return {
        "proj_w": proj_w, "proj_b": proj_b,
        "query_embed": query_embed,
        "fc_w": fc_w, "fc_b": fc_b,
    }


if __name__ == "__main__":
    B, Cin, H, W = 2, 4, 16, 16
    hidden_dim, num_class = 32, 8

    key = jax.random.PRNGKey(0)
    k_in, k_par = jax.random.split(key)
    x = jax.random.normal(k_in, (B, Cin, H, W), jnp.float32)   # NCHW like PyTorch
    params = init_params(k_par, Cin, hidden_dim, num_class)

    out = jax.jit(query2label_forward)(x, params)
    out = jax.block_until_ready(out)
    assert out.shape == (B, num_class), out.shape
    assert out.dtype == jnp.float32
    assert bool(jnp.all(jnp.isfinite(out)))
    print("KERNEL_OK")
</pallas_src>

<mosaic_0001>
module attributes {stable_mosaic.version = 11 : i64} {
  func.func @_q2l_fused_kernel(%arg0: i32, %arg1: memref<1x4x256xbf16, #tpu.memory_space<vmem>>, %arg2: memref<256x128xf32, #tpu.memory_space<vmem>>, %arg3: memref<4x128xbf16, #tpu.memory_space<vmem>>, %arg4: memref<1x128xf32, #tpu.memory_space<vmem>>, %arg5: memref<128x128xf32, #tpu.memory_space<vmem>>, %arg6: memref<128x128xf32, #tpu.memory_space<vmem>>, %arg7: memref<1x128xf32, #tpu.memory_space<vmem>>, %arg8: memref<1x1x128xf32, #tpu.memory_space<vmem>>) attributes {dimension_semantics = [#tpu.dimension_semantics<parallel>], iteration_bounds = array<i64: 2>, scalar_prefetch = 0 : i64, scratch_operands = 0 : i64, tpu.core_type = #tpu.core_type<tc>, window_params = [{transform_indices = @transform_0, window_bounds = array<i64: 1, 4, 256>}, {pipeline_mode = #tpu.pipeline_mode<synchronous>, transform_indices = @transform_1, window_bounds = array<i64: 256, 128>}, {pipeline_mode = #tpu.pipeline_mode<synchronous>, transform_indices = @transform_2, window_bounds = array<i64: 4, 128>}, {pipeline_mode = #tpu.pipeline_mode<synchronous>, transform_indices = @transform_3, window_bounds = array<i64: 1, 128>}, {pipeline_mode = #tpu.pipeline_mode<synchronous>, transform_indices = @transform_4, window_bounds = array<i64: 128, 128>}, {pipeline_mode = #tpu.pipeline_mode<synchronous>, transform_indices = @transform_5, window_bounds = array<i64: 128, 128>}, {pipeline_mode = #tpu.pipeline_mode<synchronous>, transform_indices = @transform_6, window_bounds = array<i64: 1, 128>}, {transform_indices = @transform_7, window_bounds = array<i64: 1, 1, 128>}]} {
    %c0 = arith.constant 0 : index
    %c0_0 = arith.constant 0 : index
    %c0_1 = arith.constant 0 : index
    %0 = vector.load %arg1[%c0, %c0_0, %c0_1] : memref<1x4x256xbf16, #tpu.memory_space<vmem>>, vector<1x4x256xbf16>
    %1 = vector.shape_cast %0 : vector<1x4x256xbf16> to vector<4x256xbf16>
    %c0_2 = arith.constant 0 : index
    %c0_3 = arith.constant 0 : index
    %2 = vector.load %arg3[%c0_2, %c0_3] : memref<4x128xbf16, #tpu.memory_space<vmem>>, vector<4x128xbf16>
    %cst = arith.constant dense<0.000000e+00> : vector<256x128xf32>
    %3 = tpu.matmul %1, %2, %cst {dimension_numbers = #tpu.dot_dimension_numbers<[0], [0], [1], [1], [0, 1, 1, 1], [], []>} : vector<4x256xbf16>, vector<4x128xbf16>, vector<256x128xf32> -> vector<256x128xf32>
    %c0_4 = arith.constant 0 : index
    %c0_5 = arith.constant 0 : index
    %4 = vector.load %arg4[%c0_4, %c0_5] : memref<1x128xf32, #tpu.memory_space<vmem>>, vector<1x128xf32>
    %5 = vector.broadcast %4 : vector<1x128xf32> to vector<256x128xf32>
    %6 = arith.addf %3, %5 : vector<256x128xf32>
    %c0_6 = arith.constant 0 : index
    %c0_7 = arith.constant 0 : index
    %7 = vector.load %arg2[%c0_6, %c0_7] : memref<256x128xf32, #tpu.memory_space<vmem>>, vector<256x128xf32>
    %8 = arith.addf %6, %7 : vector<256x128xf32>
    %9 = arith.truncf %8 : vector<256x128xf32> to vector<256x128xbf16>
    %c0_8 = arith.constant 0 : index
    %c0_9 = arith.constant 0 : index
    %10 = vector.load %arg5[%c0_8, %c0_9] : memref<128x128xf32, #tpu.memory_space<vmem>>, vector<128x128xf32>
    %11 = arith.truncf %10 : vector<128x128xf32> to vector<128x128xbf16>
    %cst_10 = arith.constant dense<0.000000e+00> : vector<128x256xf32>
    %12 = tpu.matmul %11, %9, %cst_10 {dimension_numbers = #tpu.dot_dimension_numbers<[1], [1], [0], [0], [0, 0, 1, 0], [], []>} : vector<128x128xbf16>, vector<256x128xbf16>, vector<128x256xf32> -> vector<128x256xf32>
    %cst_11 = arith.constant 0.176776692 : f32
    %13 = vector.broadcast %cst_11 : f32 to vector<128x256xf32>
    %14 = arith.mulf %12, %13 : vector<128x256xf32>
    %cst_12 = arith.constant dense<0xFF800000> : vector<128xf32>
    %15 = vector.multi_reduction <maximumf>, %14, %cst_12 [1] : vector<128x256xf32> to vector<128xf32>
    %16 = vector.shape_cast %15 : vector<128xf32> to vector<128x1xf32>
    %17 = vector.broadcast %16 : vector<128x1xf32> to vector<128x256xf32>
    %18 = arith.subf %14, %17 : vector<128x256xf32>
    %19 = math.exp %18 : vector<128x256xf32>
    %cst_13 = arith.constant dense<0.000000e+00> : vector<128xf32>
    %20 = vector.multi_reduction <add>, %19, %cst_13 [1] : vector<128x256xf32> to vector<128xf32>
    %21 = vector.shape_cast %20 : vector<128xf32> to vector<128x1xf32>
    %22 = tpu.reciprocal %21 {approx = true} : vector<128x1xf32> -> vector<128x1xf32>
    %23 = vector.broadcast %22 : vector<128x1xf32> to vector<128x256xf32>
    %24 = arith.mulf %19, %23 : vector<128x256xf32>
    %25 = arith.truncf %24 : vector<128x256xf32> to vector<128x256xbf16>
    %cst_14 = arith.constant dense<0.000000e+00> : vector<128x128xf32>
    %26 = tpu.matmul %25, %9, %cst_14 {dimension_numbers = #tpu.dot_dimension_numbers<[1], [0], [0], [1], [0, 0, 1, 1], [], []>} : vector<128x256xbf16>, vector<256x128xbf16>, vector<128x128xf32> -> vector<128x128xf32>
    %27 = arith.addf %10, %26 : vector<128x128xf32>
    %c0_15 = arith.constant 0 : index
    %c0_16 = arith.constant 0 : index
    %28 = vector.load %arg6[%c0_15, %c0_16] : memref<128x128xf32, #tpu.memory_space<vmem>>, vector<128x128xf32>
    %29 = arith.mulf %28, %27 : vector<128x128xf32>
    %cst_17 = arith.constant dense<0.000000e+00> : vector<128xf32>
    %30 = vector.multi_reduction <add>, %29, %cst_17 [1] : vector<128x128xf32> to vector<128xf32>
    %31 = vector.shape_cast %30 : vector<128xf32> to vector<1x128xf32>
    %c0_18 = arith.constant 0 : index
    %c0_19 = arith.constant 0 : index
    %32 = vector.load %arg7[%c0_18, %c0_19] : memref<1x128xf32, #tpu.memory_space<vmem>>, vector<1x128xf32>
    %33 = arith.addf %31, %32 : vector<1x128xf32>
    %34 = vector.shape_cast %33 : vector<1x128xf32> to vector<1x1x128xf32>
    %c0_20 = arith.constant 0 : index
    %c0_21 = arith.constant 0 : index
    %c0_22 = arith.constant 0 : index
    %35 = vector.load %arg8[%c0_20, %c0_21, %c0_22] : memref<1x1x128xf32, #tpu.memory_space<vmem>>, vector<1x1x128xf32>
    tpu.vector_store %arg8[%c0_20, %c0_21, %c0_22], %34 {strides = array<i32>} : memref<1x1x128xf32, #tpu.memory_space<vmem>>, vector<1x1x128xf32>,
    return
  }
  func.func @transform_0(%arg0: i32) -> (i32, i32, i32) {
    %c0_i32 = arith.constant 0 : i32
    %c0_i32_0 = arith.constant 0 : i32
    %c0_i32_1 = arith.constant 0 : i32
    return %arg0, %c0_i32, %c0_i32_0 : i32, i32, i32
  }
  func.func @transform_1(%arg0: i32) -> (i32, i32) {
    %c0_i32 = arith.constant 0 : i32
    %c0_i32_0 = arith.constant 0 : i32
    %c0_i32_1 = arith.constant 0 : i32
    return %c0_i32, %c0_i32_0 : i32, i32
  }
  func.func @transform_2(%arg0: i32) -> (i32, i32) {
    %c0_i32 = arith.constant 0 : i32
    %c0_i32_0 = arith.constant 0 : i32
    %c0_i32_1 = arith.constant 0 : i32
    return %c0_i32, %c0_i32_0 : i32, i32
  }
  func.func @transform_3(%arg0: i32) -> (i32, i32) {
    %c0_i32 = arith.constant 0 : i32
    %c0_i32_0 = arith.constant 0 : i32
    %c0_i32_1 = arith.constant 0 : i32
    return %c0_i32, %c0_i32_0 : i32, i32
  }
  func.func @transform_4(%arg0: i32) -> (i32, i32) {
    %c0_i32 = arith.constant 0 : i32
    %c0_i32_0 = arith.constant 0 : i32
    %c0_i32_1 = arith.constant 0 : i32
    return %c0_i32, %c0_i32_0 : i32, i32
  }
  func.func @transform_5(%arg0: i32) -> (i32, i32) {
    %c0_i32 = arith.constant 0 : i32
    %c0_i32_0 = arith.constant 0 : i32
    %c0_i32_1 = arith.constant 0 : i32
    return %c0_i32, %c0_i32_0 : i32, i32
  }
  func.func @transform_6(%arg0: i32) -> (i32, i32) {
    %c0_i32 = arith.constant 0 : i32
    %c0_i32_0 = arith.constant 0 : i32
    %c0_i32_1 = arith.constant 0 : i32
    return %c0_i32, %c0_i32_0 : i32, i32
  }
  func.func @transform_7(%arg0: i32) -> (i32, i32, i32) {
    %c0_i32 = arith.constant 0 : i32
    %c0_i32_0 = arith.constant 0 : i32
    %c0_i32_1 = arith.constant 0 : i32
    return %arg0, %c0_i32, %c0_i32_0 : i32, i32, i32
  }
}

</mosaic_0001>

<llo_original>
// kernel: query2label_forward.1
$region0: #{query2label_forward.1}
  #allocation0 [shape = 'u32[]', space=smem, size = 0x4, offset = 0x4, fixed_abs, tag = 'smem constant byte address 0x4 - core index']
  #allocation1 [shape = 'u32[144,128]{1,0:T(1,128)}', space=vmem, size = 0x12000, scoped, tag = 'internal scratch']
  %s0 = inlined_call_operand.vmem [shape: bf16[2,4,256], index: 0, kind: input, shape index: {}]
  %s1 = inlined_call_operand.vmem [shape: f32[256,128], index: 1, kind: input, shape index: {}]
  %s2 = inlined_call_operand.vmem [shape: bf16[4,128], index: 2, kind: input, shape index: {}]
  %s3 = inlined_call_operand.vmem [shape: f32[1,128], index: 3, kind: input, shape index: {}]
  %s4 = inlined_call_operand.vmem [shape: f32[128,128], index: 4, kind: input, shape index: {}]
  %s5 = inlined_call_operand.vmem [shape: f32[128,128], index: 5, kind: input, shape index: {}]
  %s6 = inlined_call_operand.vmem [shape: f32[1,128], index: 6, kind: input, shape index: {}]
  %s7 = inlined_call_operand.hbm [shape: f32[2,1,128], index: 7, kind: output, shape index: {}]
  %s8 = sld [smem:[#allocation0]]
  $region61: #{query2label_forward.1} parent=0
    _
  %s10 = ssub.s32 1, %s8
  %s11 = scalar_select 0, %s10, %s8
  $region1: #{query2label_forward.1} parent=0
    #allocation2 [shape = 'u8[1024]{0}', space=vmem, size = 0x400, scoped, tag = 'output window, operand 0']
    #allocation3 [shape = 's32[2]{0}', space=sflag, size = 0x8, scoped, tag = 'scoped memory for query2label_forward.1']
    %12 = vsyncpa [#allocation3], 0
    %s13 = scalar_lea.sflag [#allocation3], 1
    %14 = vsyncpa %s13, 0
    loop: start=0, step=1, limit=4
    $region2: #{query2label_forward.1} parent=1 // loop_pre_header
      _
    $region3: #{query2label_forward.1} parent=1 // loop_header
      %s16 = sphi 0, %s20
      %p17 = scmp.ge.s32.totalorder %s16, 4
      %s26 = sphi 0, %s28
      %s29 = sphi 0, %s26
      %s30 = sphi 0, %s29
      %s46 = sphi 0, %s30
      %s50 = sphi 0, %s50
      %s52 = sphi 0, %s50
      %s53 = sphi 0, %s52
      %s67 = sphi 0, %s53
      %s71 = sphi 0, %s71
      %s73 = sphi 0, %s71
      %s74 = sphi 0, %s73
      %s88 = sphi 0, %s74
      %s92 = sphi 0, %s92
      %s94 = sphi 0, %s92
      %s95 = sphi 0, %s94
      %s109 = sphi 0, %s95
      %s113 = sphi 0, %s113
      %s115 = sphi 0, %s113
      %s116 = sphi 0, %s115
      %s130 = sphi 0, %s116
      %s134 = sphi 0, %s134
      %s136 = sphi 0, %s134
      %s137 = sphi 0, %s136
      %s151 = sphi 0, %s137
      %s155 = sphi 0, %s155
      %s157 = sphi 0, %s155
      %s158 = sphi 0, %s157
      %s172 = sphi 0, %s158
      %s178 = sphi 0, %s180
      %s181 = sphi 0, %s178
      %s182 = sphi 0, %s181
      %s198 = sphi 0, %s182
    $region4: #{query2label_forward.1} parent=1 // loop_header_branch
      %19 = sbr.rel (%p17) target = $region8
    $region5: #{query2label_forward.1} parent=1 // loop_body
      %s21 = ssub.s32 %s16, 1
      %s22 = ssub.s32 %s16, 2
      %s23 = sadd.s32 %s16, 1
      %s24 = ssub.s32 %s16, %s23
      %p25 = scmp.eq.s32.totalorder %s24, 0
      %s27 = sadd.s32 %s26, 1
      %s28 = scalar_select %p25, %s26, %s27
      %p31 = pneg %p25
      %p32 = scmp.eq.s32.totalorder %s16, 1
      %p33 = por %p31, %p32
      %p34 = scmp.ne.s32.totalorder %s26, %s29
      %p35 = scmp.eq.s32.totalorder %s16, 0
      %p36 = por %p34, %p35
      %p37 = scmp.ne.s32.totalorder %s26, %s29
      %p38 = scmp.eq.s32.totalorder %s21, 1
      %p39 = por %p37, %p38
      %p40 = scmp.ne.s32.totalorder %s29, %s30
      %p41 = scmp.eq.s32.totalorder %s21, 0
      %p42 = por %p40, %p41
      %p43 = scmp.ne.s32.totalorder %s29, %s30
      %p44 = scmp.eq.s32.totalorder %s22, 1
      %p45 = por %p43, %p44
      %p47 = scmp.ne.s32.totalorder %s30, %s46
      %p48 = scmp.eq.s32.totalorder %s22, 0
      %p49 = por %p47, %p48
      %s51 = sadd.s32 %s50, 1
      %p54 = scmp.eq.s32.totalorder %s16, 1
      %p55 = scmp.ne.s32.totalorder %s50, %s52
      %p56 = scmp.eq.s32.totalorder %s16, 0
      %p57 = por %p55, %p56
      %p58 = scmp.ne.s32.totalorder %s50, %s52
      %p59 = scmp.eq.s32.totalorder %s21, 1
      %p60 = por %p58, %p59
      %p61 = scmp.ne.s32.totalorder %s52, %s53
      %p62 = scmp.eq.s32.totalorder %s21, 0
      %p63 = por %p61, %p62
      %p64 = scmp.ne.s32.totalorder %s52, %s53
      %p65 = scmp.eq.s32.totalorder %s22, 1
      %p66 = por %p64, %p65
      %p68 = scmp.ne.s32.totalorder %s53, %s67
      %p69 = scmp.eq.s32.totalorder %s22, 0
      %p70 = por %p68, %p69
      %s72 = sadd.s32 %s71, 1
      %p75 = scmp.eq.s32.totalorder %s16, 1
      %p76 = scmp.ne.s32.totalorder %s71, %s73
      %p77 = scmp.eq.s32.totalorder %s16, 0
      %p78 = por %p76, %p77
      %p79 = scmp.ne.s32.totalorder %s71, %s73
      %p80 = scmp.eq.s32.totalorder %s21, 1
      %p81 = por %p79, %p80
      %p82 = scmp.ne.s32.totalorder %s73, %s74
      %p83 = scmp.eq.s32.totalorder %s21, 0
      %p84 = por %p82, %p83
      %p85 = scmp.ne.s32.totalorder %s73, %s74
      %p86 = scmp.eq.s32.totalorder %s22, 1
      %p87 = por %p85, %p86
      %p89 = scmp.ne.s32.totalorder %s74, %s88
      %p90 = scmp.eq.s32.totalorder %s22, 0
      %p91 = por %p89, %p90
      %s93 = sadd.s32 %s92, 1
      %p96 = scmp.eq.s32.totalorder %s16, 1
      %p97 = scmp.ne.s32.totalorder %s92, %s94
      %p98 = scmp.eq.s32.totalorder %s16, 0
      %p99 = por %p97, %p98
      %p100 = scmp.ne.s32.totalorder %s92, %s94
      %p101 = scmp.eq.s32.totalorder %s21, 1
      %p102 = por %p100, %p101
      %p103 = scmp.ne.s32.totalorder %s94, %s95
      %p104 = scmp.eq.s32.totalorder %s21, 0
      %p105 = por %p103, %p104
      %p106 = scmp.ne.s32.totalorder %s94, %s95
      %p107 = scmp.eq.s32.totalorder %s22, 1
      %p108 = por %p106, %p107
      %p110 = scmp.ne.s32.totalorder %s95, %s109
      %p111 = scmp.eq.s32.totalorder %s22, 0
      %p112 = por %p110, %p111
      %s114 = sadd.s32 %s113, 1
      %p117 = scmp.eq.s32.totalorder %s16, 1
      %p118 = scmp.ne.s32.totalorder %s113, %s115
      %p119 = scmp.eq.s32.totalorder %s16, 0
      %p120 = por %p118, %p119
      %p121 = scmp.ne.s32.totalorder %s113, %s115
      %p122 = scmp.eq.s32.totalorder %s21, 1
      %p123 = por %p121, %p122
      %p124 = scmp.ne.s32.totalorder %s115, %s116
      %p125 = scmp.eq.s32.totalorder %s21, 0
      %p126 = por %p124, %p125
      %p127 = scmp.ne.s32.totalorder %s115, %s116
      %p128 = scmp.eq.s32.totalorder %s22, 1
      %p129 = por %p127, %p128
      %p131 = scmp.ne.s32.totalorder %s116, %s130
      %p132 = scmp.eq.s32.totalorder %s22, 0
      %p133 = por %p131, %p132
      %s135 = sadd.s32 %s134, 1
      %p138 = scmp.eq.s32.totalorder %s16, 1
      %p139 = scmp.ne.s32.totalorder %s134, %s136
      %p140 = scmp.eq.s32.totalorder %s16, 0
      %p141 = por %p139, %p140
      %p142 = scmp.ne.s32.totalorder %s134, %s136
      %p143 = scmp.eq.s32.totalorder %s21, 1
      %p144 = por %p142, %p143
      %p145 = scmp.ne.s32.totalorder %s136, %s137
      %p146 = scmp.eq.s32.totalorder %s21, 0
      %p147 = por %p145, %p146
      %p148 = scmp.ne.s32.totalorder %s136, %s137
      %p149 = scmp.eq.s32.totalorder %s22, 1
      %p150 = por %p148, %p149
      %p152 = scmp.ne.s32.totalorder %s137, %s151
      %p153 = scmp.eq.s32.totalorder %s22, 0
      %p154 = por %p152, %p153
      %s156 = sadd.s32 %s155, 1
      %p159 = scmp.eq.s32.totalorder %s16, 1
      %p160 = scmp.ne.s32.totalorder %s155, %s157
      %p161 = scmp.eq.s32.totalorder %s16, 0
      %p162 = por %p160, %p161
      %p163 = scmp.ne.s32.totalorder %s155, %s157
      %p164 = scmp.eq.s32.totalorder %s21, 1
      %p165 = por %p163, %p164
      %p166 = scmp.ne.s32.totalorder %s157, %s158
      %p167 = scmp.eq.s32.totalorder %s21, 0
      %p168 = por %p166, %p167
      %p169 = scmp.ne.s32.totalorder %s157, %s158
      %p170 = scmp.eq.s32.totalorder %s22, 1
      %p171 = por %p169, %p170
      %p173 = scmp.ne.s32.totalorder %s158, %s172
      %p174 = scmp.eq.s32.totalorder %s22, 0
      %p175 = por %p173, %p174
      %s176 = ssub.s32 %s16, %s23
      %p177 = scmp.eq.s32.totalorder %s176, 0
      %s179 = sadd.s32 %s178, 1
      %s180 = scalar_select %p177, %s178, %s179
      %p183 = pneg %p177
      %p184 = scmp.eq.s32.totalorder %s16, 1
      %p185 = por %p183, %p184
      %p186 = scmp.ne.s32.totalorder %s178, %s181
      %p187 = scmp.eq.s32.totalorder %s16, 0
      %p188 = por %p186, %p187
      %p189 = scmp.ne.s32.totalorder %s178, %s181
      %p190 = scmp.eq.s32.totalorder %s21, 1
      %p191 = por %p189, %p190
      %p192 = scmp.ne.s32.totalorder %s181, %s182
      %p193 = scmp.eq.s32.totalorder %s21, 0
      %p194 = por %p192, %p193
      %p195 = scmp.ne.s32.totalorder %s181, %s182
      %p196 = scmp.eq.s32.totalorder %s22, 1
      %p197 = por %p195, %p196
      %p199 = scmp.ne.s32.totalorder %s182, %s198
      %p200 = scmp.eq.s32.totalorder %s22, 0
      %p201 = por %p199, %p200
      %p202 = scmp.le.s32.totalorder 1, %s16
      %p203 = scmp.lt.s32.totalorder %s16, 3
      %p204 = pnand %p202, %p203
      %p205 = pneg %p204
      // Predicated region
      $region9: #{query2label_forward.1} parent=5 // pred_check
        _
      $region10: #{query2label_forward.1} parent=5 // pred_check_branch
        %207 = sbr.rel (%p204) target = $region12
      $region11: #{query2label_forward.1} parent=5 // pred_region
        %s208 = ssub.s32 %s16, 1
        // Predicated region
        $region13: #{query2label_forward.1} parent=11 // pred_check
          %p209 = pneg %p63
        $region14: #{query2label_forward.1} parent=11 // pred_check_branch
          %211 = sbr.rel (%p209) target = $region16
        $region15: #{query2label_forward.1} parent=11 // pred_region
          _
        $region16: #{query2label_forward.1} parent=11 // pred_fallthru
          _
        // Predicated region
        $region17: #{query2label_forward.1} parent=11 // pred_check
          %p212 = pneg %p84
        $region18: #{query2label_forward.1} parent=11 // pred_check_branch
          %214 = sbr.rel (%p212) target = $region20
        $region19: #{query2label_forward.1} parent=11 // pred_region
          _
        $region20: #{query2label_forward.1} parent=11 // pred_fallthru
          _
        // Predicated region
        $region21: #{query2label_forward.1} parent=11 // pred_check
          %p215 = pneg %p105
        $region22: #{query2label_forward.1} parent=11 // pred_check_branch
          %217 = sbr.rel (%p215) target = $region24
        $region23: #{query2label_forward.1} parent=11 // pred_region
          _
        $region24: #{query2label_forward.1} parent=11 // pred_fallthru
          _
        // Predicated region
        $region25: #{query2label_forward.1} parent=11 // pred_check
          %p218 = pneg %p126
        $region26: #{query2label_forward.1} parent=11 // pred_check_branch
          %220 = sbr.rel (%p218) target = $region28
        $region27: #{query2label_forward.1} parent=11 // pred_region
          _
        $region28: #{query2label_forward.1} parent=11 // pred_fallthru
          _
        // Predicated region
        $region29: #{query2label_forward.1} parent=11 // pred_check
          %p221 = pneg %p147
        $region30: #{query2label_forward.1} parent=11 // pred_check_branch
          %223 = sbr.rel (%p221) target = $region32
        $region31: #{query2label_forward.1} parent=11 // pred_region
          _
        $region32: #{query2label_forward.1} parent=11 // pred_fallthru
          _
        // Predicated region
        $region33: #{query2label_forward.1} parent=11 // pred_check
          %p224 = pneg %p168
        $region34: #{query2label_forward.1} parent=11 // pred_check_branch
          %226 = sbr.rel (%p224) target = $region36
        $region35: #{query2label_forward.1} parent=11 // pred_region
          _
        $region36: #{query2label_forward.1} parent=11 // pred_fallthru
          _
      $region12: #{query2label_forward.1} parent=5 // pred_fallthru
        _
      %p227 = scmp.lt.s32.totalorder %s16, 2
      // Predicated region
      $region37: #{query2label_forward.1} parent=5 // pred_check
        %p228 = pneg %p227
      $region38: #{query2label_forward.1} parent=5 // pred_check_branch
        %230 = sbr.rel (%p228) target = $region40
      $region39: #{query2label_forward.1} parent=5 // pred_region
        // Predicated region
        $region41: #{query2label_forward.1} parent=39 // pred_check
          %p231 = pneg %p36
        $region42: #{query2label_forward.1} parent=39 // pred_check_branch
          %233 = sbr.rel (%p231) target = $region44
        $region43: #{query2label_forward.1} parent=39 // pred_region
          %p234 = scmp.lt.s32.totalorder %s16, 1
          %s235 = scalar_select %p234, %s16, 1
          %s236 = smul.addr %s235, 2
          %s237 = smul.addr %s236, 2
          %s238 = scalar_lea.vmem %s0, %s237
        $region44: #{query2label_forward.1} parent=39 // pred_fallthru
          _
      $region40: #{query2label_forward.1} parent=5 // pred_fallthru
        _
      %p239 = scmp.le.s32.totalorder 1, %s16
      %p240 = scmp.lt.s32.totalorder %s16, 3
      %p241 = pnand %p239, %p240
      %p242 = pneg %p241
      // Predicated region
      $region45: #{query2label_forward.1} parent=5 // pred_check
        _
      $region46: #{query2label_forward.1} parent=5 // pred_check_branch
        %244 = sbr.rel (%p241) target = $region48
      $region47: #{query2label_forward.1} parent=5 // pred_region
        %s245 = ssub.s32 %s16, 1
        %p246 = scmp.lt.s32.totalorder %s21, 1
        %s247 = scalar_select %p246, %s21, 1
        %s248 = smul.addr %s247, 2
        %s249 = smul.addr %s248, 2
        %s250 = scalar_lea.vmem %s0, %s249
        %p251 = pneg %p42
        %p252 = pneg %p39
        %p253 = pneg %p63
        %p254 = pneg %p60
        %p255 = pneg %p84
        %p256 = pneg %p81
        %p257 = pneg %p105
        %p258 = pneg %p102
        %p259 = pneg %p126
        %p260 = pneg %p123
        %p261 = pneg %p147
        %p262 = pneg %p144
        %p263 = pneg %p168
        %p264 = pneg %p165
        %p265 = pneg %p194
        %p266 = pneg %p191
        %s267 = sand.u32 %s181, 1
        %s268 = scalar_lea.sflag [#allocation3], %s267
        %s269 = sand.u32 %s181, 1
        %s270 = scalar_lea.vmem [#allocation2], %s269
        %p271 = scmp.lt.s32.totalorder %s21, 1
        %s272 = scalar_select %p271, %s21, 1
        %s273 = smul.addr %s272, 2
        %s274 = smul.addr %s273, 2
        %s275 = scalar_lea.vmem %s0, %s274
        %v277 = vld [vmem:[%s275] sm:$0xf]
        %v278 = vld [vmem:[%s2] sm:$0x3]
        %v279 = vld [vmem:[%s3] sm:$0x1]
        %v281 = vlaneseq
        %v282 = vshrl.u32 %v281, 7
        %v283 = vsub.s32 0, %v282
        %v284 = vrot.slane %v279, %v283
        %v288 = vunpack.c.l.s4 1983009808
        %v289 = vunpack.c.0.s8 %v288
        %v290 = vlaneseq
        %v291 = vshrl.u32 %v290, 7
        %v292 = vsub.s32 %v289, %v291
        %v293 = vrot.slane %v277, %v292
        %v294 = vcombine.high %v293, %v293
        %297 = vxpose.xlu0.c.b16.start [1/8] %v293, 128
        %298 = vxpose.xlu0.c.b16.cont [2/8] 0, 128
        %299 = vxpose.xlu0.c.b16.cont [3/8] 0, 128
        %300 = vxpose.xlu0.c.b16.cont [4/8] 0, 128
        %301 = vxpose.xlu0.c.b16.cont [5/8] 0, 128
        %302 = vxpose.xlu0.c.b16.cont [6/8] 0, 128
        %303 = vxpose.xlu0.c.b16.cont [7/8] 0, 128
        %304 = vxpose.xlu0.c.b16.end [8/8] 0, 128
        %v305 = vpop.trf.xlu0
        %v306 = vpop.trf.xlu0
        %v307 = vpop.trf.xlu0
        %v308 = vpop.trf.xlu0
        %v309 = vpop.trf.xlu0
        %v310 = vpop.trf.xlu0
        %v311 = vpop.trf.xlu0
        %v312 = vpop.trf.xlu0
        %313 = vxpose.xlu0.c.b16.start [1/8] %v294, 128
        %314 = vxpose.xlu0.c.b16.cont [2/8] 0, 128
        %315 = vxpose.xlu0.c.b16.cont [3/8] 0, 128
        %316 = vxpose.xlu0.c.b16.cont [4/8] 0, 128
        %317 = vxpose.xlu0.c.b16.cont [5/8] 0, 128
        %318 = vxpose.xlu0.c.b16.cont [6/8] 0, 128
        %319 = vxpose.xlu0.c.b16.cont [7/8] 0, 128
        %320 = vxpose.xlu0.c.b16.end [8/8] 0, 128
        %v321 = vpop.trf.xlu0
        %v322 = vpop.trf.xlu0
        %v323 = vpop.trf.xlu0
        %v324 = vpop.trf.xlu0
        %v325 = vpop.trf.xlu0
        %v326 = vpop.trf.xlu0
        %v327 = vpop.trf.xlu0
        %v328 = vpop.trf.xlu0
        %vm329 = vcmask 31744
        %v331 = vsel %vm329, %v305, 0
        %v334 = vsel %vm329, %v306, 0
        %v337 = vsel %vm329, %v307, 0
        %v340 = vsel %vm329, %v308, 0
        %v343 = vsel %vm329, %v309, 0
        %v346 = vsel %vm329, %v310, 0
        %v349 = vsel %vm329, %v311, 0
        %v352 = vsel %vm329, %v312, 0
        %v355 = vsel %vm329, %v321, 0
        %v358 = vsel %vm329, %v322, 0
        %v361 = vsel %vm329, %v323, 0
        %v364 = vsel %vm329, %v324, 0
        %v367 = vsel %vm329, %v325, 0
        %v370 = vsel %vm329, %v326, 0
        %v373 = vsel %vm329, %v327, 0
        %v376 = vsel %vm329, %v328, 0
        %vm378 = vcmask 1041408
        %v380 = vsel %vm378, %v278, 0
        %382 = vmatprep.subr.bf16.mxu0 0
        %383 = vmatpush1.bf16.msra.mxu0 %v380
        %384 = vmatprep.subr.bf16.mxu0 0
        %385 = vmatpush1.bf16.msra.mxu0 0
        %386 = vmatprep.subr.bf16.mxu0 0
        %387 = vmatpush1.bf16.msra.mxu0 0
        %388 = vmatprep.subr.bf16.mxu0 0
        %389 = vmatpush1.bf16.msra.mxu0 0
        %390 = vmatprep.subr.bf16.mxu0 0
        %391 = vmatpush1.bf16.msra.mxu0 0
        %392 = vmatprep.subr.bf16.mxu0 0
        %393 = vmatpush1.bf16.msra.mxu0 0
        %394 = vmatprep.subr.bf16.mxu0 0
        %395 = vmatpush1.bf16.msra.mxu0 0
        %396 = vmatprep.subr.bf16.mxu0 0
        %397 = vmatpush1.bf16.msra.mxu0 0
        %398 = vmatprep.subr.bf16.mxu0 0
        %399 = vmatpush1.bf16.msra.mxu0 0
        %400 = vmatprep.subr.bf16.mxu0 0
        %401 = vmatpush1.bf16.msra.mxu0 0
        %402 = vmatprep.subr.bf16.mxu0 0
        %403 = vmatpush1.bf16.msra.mxu0 0
        %404 = vmatprep.subr.bf16.mxu0 0
        %405 = vmatpush1.bf16.msra.mxu0 0
        %406 = vmatprep.subr.bf16.mxu0 0
        %407 = vmatpush1.bf16.msra.mxu0 0
        %408 = vmatprep.subr.bf16.mxu0 0
        %409 = vmatpush1.bf16.msra.mxu0 0
        %410 = vmatprep.subr.bf16.mxu0 0
        %411 = vmatpush1.bf16.msra.mxu0 0
        %412 = vmatprep.subr.bf16.mxu0 0
        %413 = vmatpush1.bf16.msra.mxu0 0
        %414 = vmatprep.mubr.bf16.mxu0 0
        %415 = vmatmul.mubr.bf16.gmra.mrb[0].mxu0 %v331
        %v416 = vpop.f32.mrb[0].mxu0
        %v417 = vadd.f32 %v284, %v416
        %v418 = vpop.f32.mrb[0].mxu0
        %v419 = vpop.f32.mrb[0].mxu0
        %v420 = vadd.f32 %v284, %v419
        %v421 = vpop.f32.mrb[0].mxu0
        %422 = vmatprep.mubr.bf16.mxu0 0
        %423 = vmatmul.mubr.bf16.gmra.mrb[0].mxu0 %v334
        %v424 = vpop.f32.mrb[0].mxu0
        %v425 = vadd.f32 %v284, %v424
        %v426 = vpop.f32.mrb[0].mxu0
        %v427 = vpop.f32.mrb[0].mxu0
        %v428 = vadd.f32 %v284, %v427
        %v429 = vpop.f32.mrb[0].mxu0
        %430 = vmatprep.mubr.bf16.mxu0 0
        %431 = vmatmul.mubr.bf16.gmra.mrb[0].mxu0 %v337
        %v432 = vpop.f32.mrb[0].mxu0
        %v433 = vadd.f32 %v284, %v432
        %v434 = vpop.f32.mrb[0].mxu0
        %v435 = vpop.f32.mrb[0].mxu0
        %v436 = vadd.f32 %v284, %v435
        %v437 = vpop.f32.mrb[0].mxu0
        %438 = vmatprep.mubr.bf16.mxu0 0
        %439 = vmatmul.mubr.bf16.gmra.mrb[0].mxu0 %v340
        %v440 = vpop.f32.mrb[0].mxu0
        %v441 = vadd.f32 %v284, %v440
        %v442 = vpop.f32.mrb[0].mxu0
        %v443 = vpop.f32.mrb[0].mxu0
        %v444 = vadd.f32 %v284, %v443
        %v445 = vpop.f32.mrb[0].mxu0
        %446 = vmatprep.mubr.bf16.mxu0 0
        %447 = vmatmul.mubr.bf16.gmra.mrb[0].mxu0 %v343
        %v448 = vpop.f32.mrb[0].mxu0
        %v449 = vadd.f32 %v284, %v448
        %v450 = vpop.f32.mrb[0].mxu0
        %v451 = vpop.f32.mrb[0].mxu0
        %v452 = vadd.f32 %v284, %v451
        %v453 = vpop.f32.mrb[0].mxu0
        %454 = vmatprep.mubr.bf16.mxu0 0
        %455 = vmatmul.mubr.bf16.gmra.mrb[0].mxu0 %v346
        %v456 = vpop.f32.mrb[0].mxu0
        %v457 = vadd.f32 %v284, %v456
        %v458 = vpop.f32.mrb[0].mxu0
        %v459 = vpop.f32.mrb[0].mxu0
        %v460 = vadd.f32 %v284, %v459
        %v461 = vpop.f32.mrb[0].mxu0
        %462 = vmatprep.mubr.bf16.mxu0 0
        %463 = vmatmul.mubr.bf16.gmra.mrb[0].mxu0 %v349
        %v464 = vpop.f32.mrb[0].mxu0
        %v465 = vadd.f32 %v284, %v464
        %v466 = vpop.f32.mrb[0].mxu0
        %v467 = vpop.f32.mrb[0].mxu0
        %v468 = vadd.f32 %v284, %v467
        %v469 = vpop.f32.mrb[0].mxu0
        %470 = vmatprep.mubr.bf16.mxu0 0
        %471 = vmatmul.mubr.bf16.gmra.mrb[0].mxu0 %v352
        %v472 = vpop.f32.mrb[0].mxu0
        %v473 = vadd.f32 %v284, %v472
        %v474 = vpop.f32.mrb[0].mxu0
        %v475 = vpop.f32.mrb[0].mxu0
        %v476 = vadd.f32 %v284, %v475
        %v477 = vpop.f32.mrb[0].mxu0
        %478 = vmatprep.mubr.bf16.mxu0 0
        %479 = vmatmul.mubr.bf16.gmra.mrb[0].mxu0 %v355
        %v480 = vpop.f32.mrb[0].mxu0
        %v481 = vadd.f32 %v284, %v480
        %v482 = vpop.f32.mrb[0].mxu0
        %v483 = vpop.f32.mrb[0].mxu0
        %v484 = vadd.f32 %v284, %v483
        %v485 = vpop.f32.mrb[0].mxu0
        %486 = vmatprep.mubr.bf16.mxu0 0
        %487 = vmatmul.mubr.bf16.gmra.mrb[0].mxu0 %v358
        %v488 = vpop.f32.mrb[0].mxu0
        %v489 = vadd.f32 %v284, %v488
        %v490 = vpop.f32.mrb[0].mxu0
        %v491 = vpop.f32.mrb[0].mxu0
        %v492 = vadd.f32 %v284, %v491
        %v493 = vpop.f32.mrb[0].mxu0
        %494 = vmatprep.mubr.bf16.mxu0 0
        %495 = vmatmul.mubr.bf16.gmra.mrb[0].mxu0 %v361
        %v496 = vpop.f32.mrb[0].mxu0
        %v497 = vadd.f32 %v284, %v496
        %v498 = vpop.f32.mrb[0].mxu0
        %v499 = vpop.f32.mrb[0].mxu0
        %v500 = vadd.f32 %v284, %v499
        %v501 = vpop.f32.mrb[0].mxu0
        %502 = vmatprep.mubr.bf16.mxu0 0
        %503 = vmatmul.mubr.bf16.gmra.mrb[0].mxu0 %v364
        %v504 = vpop.f32.mrb[0].mxu0
        %v505 = vadd.f32 %v284, %v504
        %v506 = vpop.f32.mrb[0].mxu0
        %v507 = vpop.f32.mrb[0].mxu0
        %v508 = vadd.f32 %v284, %v507
        %v509 = vpop.f32.mrb[0].mxu0
        %510 = vmatprep.mubr.bf16.mxu0 0
        %511 = vmatmul.mubr.bf16.gmra.mrb[0].mxu0 %v367
        %v512 = vpop.f32.mrb[0].mxu0
        %v513 = vadd.f32 %v284, %v512
        %v514 = vpop.f32.mrb[0].mxu0
        %v515 = vpop.f32.mrb[0].mxu0
        %v516 = vadd.f32 %v284, %v515
        %v517 = vpop.f32.mrb[0].mxu0
        %518 = vmatprep.mubr.bf16.mxu0 0
        %519 = vmatmul.mubr.bf16.gmra.mrb[0].mxu0 %v370
        %v520 = vpop.f32.mrb[0].mxu0
        %v521 = vadd.f32 %v284, %v520
        %v522 = vpop.f32.mrb[0].mxu0
        %v523 = vpop.f32.mrb[0].mxu0
        %v524 = vadd.f32 %v284, %v523
        %v525 = vpop.f32.mrb[0].mxu0
        %526 = vmatprep.mubr.bf16.mxu0 0
        %527 = vmatmul.mubr.bf16.gmra.mrb[0].mxu0 %v373
        %v528 = vpop.f32.mrb[0].mxu0
        %v529 = vadd.f32 %v284, %v528
        %v530 = vpop.f32.mrb[0].mxu0
        %v531 = vpop.f32.mrb[0].mxu0
        %v532 = vadd.f32 %v284, %v531
        %v533 = vpop.f32.mrb[0].mxu0
        %534 = vmatprep.mubr.bf16.mxu0 0
        %535 = vmatmul.mubr.bf16.gmra.mrb[0].mxu0 %v376
        %v536 = vpop.f32.mrb[0].mxu0
        %v537 = vadd.f32 %v284, %v536
        %v538 = vpop.f32.mrb[0].mxu0
        %v539 = vpop.f32.mrb[0].mxu0
        %v540 = vadd.f32 %v284, %v539
        %v541 = vpop.f32.mrb[0].mxu0
        %542 = vdwg.mxu0
        %v543 = vld [vmem:[%s1] sm:$0xff]
        %v544 = vld [vmem:[%s1 + $0x8] sm:$0xff]
        %v545 = vld [vmem:[%s1 + $0x10] sm:$0xff]
        %v546 = vld [vmem:[%s1 + $0x18] sm:$0xff]
        %v547 = vld [vmem:[%s1 + $0x20] sm:$0xff]
        %v548 = vld [vmem:[%s1 + $0x28] sm:$0xff]
        %v549 = vld [vmem:[%s1 + $0x30] sm:$0xff]
        %v550 = vld [vmem:[%s1 + $0x38] sm:$0xff]
        %v551 = vld [vmem:[%s1 + $0x40] sm:$0xff]
        %v552 = vld [vmem:[%s1 + $0x48] sm:$0xff]
        %v553 = vld [vmem:[%s1 + $0x50] sm:$0xff]
        %v554 = vld [vmem:[%s1 + $0x58] sm:$0xff]
        %v555 = vld [vmem:[%s1 + $0x60] sm:$0xff]
        %v556 = vld [vmem:[%s1 + $0x68] sm:$0xff]
        %v557 = vld [vmem:[%s1 + $0x70] sm:$0xff]
        %v558 = vld [vmem:[%s1 + $0x78] sm:$0xff]
        %v559 = vld [vmem:[%s1 + $0x80] sm:$0xff]
        %v560 = vld [vmem:[%s1 + $0x88] sm:$0xff]
        %v561 = vld [vmem:[%s1 + $0x90] sm:$0xff]
        %v562 = vld [vmem:[%s1 + $0x98] sm:$0xff]
        %v563 = vld [vmem:[%s1 + $0xa0] sm:$0xff]
        %v564 = vld [vmem:[%s1 + $0xa8] sm:$0xff]
        %v565 = vld [vmem:[%s1 + $0xb0] sm:$0xff]
        %v566 = vld [vmem:[%s1 + $0xb8] sm:$0xff]
        %v567 = vld [vmem:[%s1 + $0xc0] sm:$0xff]
        %v568 = vld [vmem:[%s1 + $0xc8] sm:$0xff]
        %v569 = vld [vmem:[%s1 + $0xd0] sm:$0xff]
        %v570 = vld [vmem:[%s1 + $0xd8] sm:$0xff]
        %v571 = vld [vmem:[%s1 + $0xe0] sm:$0xff]
        %v572 = vld [vmem:[%s1 + $0xe8] sm:$0xff]
        %v573 = vld [vmem:[%s1 + $0xf0] sm:$0xff]
        %v574 = vld [vmem:[%s1 + $0xf8] sm:$0xff]
        %v575 = vadd.f32 %v417, %v543
        %v576 = vadd.f32 %v420, %v544
        %v577 = vadd.f32 %v425, %v545
        %v578 = vadd.f32 %v428, %v546
        %v579 = vadd.f32 %v433, %v547
        %v580 = vadd.f32 %v436, %v548
        %v581 = vadd.f32 %v441, %v549
        %v582 = vadd.f32 %v444, %v550
        %v583 = vadd.f32 %v449, %v551
        %v584 = vadd.f32 %v452, %v552
        %v585 = vadd.f32 %v457, %v553
        %v586 = vadd.f32 %v460, %v554
        %v587 = vadd.f32 %v465, %v555
        %v588 = vadd.f32 %v468, %v556
        %v589 = vadd.f32 %v473, %v557
        %v590 = vadd.f32 %v476, %v558
        %v591 = vadd.f32 %v481, %v559
        %v592 = vadd.f32 %v484, %v560
        %v593 = vadd.f32 %v489, %v561
        %v594 = vadd.f32 %v492, %v562
        %v595 = vadd.f32 %v497, %v563
        %v596 = vadd.f32 %v500, %v564
        %v597 = vadd.f32 %v505, %v565
        %v598 = vadd.f32 %v508, %v566
        %v599 = vadd.f32 %v513, %v567
        %v600 = vadd.f32 %v516, %v568
        %v601 = vadd.f32 %v521, %v569
        %v602 = vadd.f32 %v524, %v570
        %v603 = vadd.f32 %v529, %v571
        %v604 = vadd.f32 %v532, %v572
        %v605 = vadd.f32 %v537, %v573
        %v606 = vadd.f32 %v540, %v574
        %v607 = vpack.c.bf16 %v576, %v575
        %v608 = vpack.c.bf16 %v578, %v577
        %v609 = vpack.c.bf16 %v580, %v579
        %v610 = vpack.c.bf16 %v582, %v581
        %v611 = vpack.c.bf16 %v584, %v583
        %v612 = vpack.c.bf16 %v586, %v585
        %v613 = vpack.c.bf16 %v588, %v587
        %v614 = vpack.c.bf16 %v590, %v589
        %v615 = vpack.c.bf16 %v592, %v591
        %v616 = vpack.c.bf16 %v594, %v593
        %v617 = vpack.c.bf16 %v596, %v595
        %v618 = vpack.c.bf16 %v598, %v597
        %v619 = vpack.c.bf16 %v600, %v599
        %v620 = vpack.c.bf16 %v602, %v601
        %v621 = vpack.c.bf16 %v604, %v603
        %v622 = vpack.c.bf16 %v606, %v605
        %v623 = vld [vmem:[%s4] sm:$0xff]
        %v624 = vld [vmem:[%s4 + $0x8] sm:$0xff]
        %v625 = vld [vmem:[%s4 + $0x10] sm:$0xff]
        %v626 = vld [vmem:[%s4 + $0x18] sm:$0xff]
        %v627 = vld [vmem:[%s4 + $0x20] sm:$0xff]
        %v628 = vld [vmem:[%s4 + $0x28] sm:$0xff]
        %v629 = vld [vmem:[%s4 + $0x30] sm:$0xff]
        %v630 = vld [vmem:[%s4 + $0x38] sm:$0xff]
        %v631 = vld [vmem:[%s4 + $0x40] sm:$0xff]
        %v632 = vld [vmem:[%s4 + $0x48] sm:$0xff]
        %v633 = vld [vmem:[%s4 + $0x50] sm:$0xff]
        %v634 = vld [vmem:[%s4 + $0x58] sm:$0xff]
        %v635 = vld [vmem:[%s4 + $0x60] sm:$0xff]
        %v636 = vld [vmem:[%s4 + $0x68] sm:$0xff]
        %v637 = vld [vmem:[%s4 + $0x70] sm:$0xff]
        %v638 = vld [vmem:[%s4 + $0x78] sm:$0xff]
        %v639 = vpack.c.bf16 %v624, %v623
        %v640 = vpack.c.bf16 %v626, %v625
        %v641 = vpack.c.bf16 %v628, %v627
        %v642 = vpack.c.bf16 %v630, %v629
        %v643 = vpack.c.bf16 %v632, %v631
        %v644 = vpack.c.bf16 %v634, %v633
        %v645 = vpack.c.bf16 %v636, %v635
        %v646 = vpack.c.bf16 %v638, %v637
        %647 = vmatprep.subr.bf16.mxu0 0
        %648 = vmatpush1.bf16.xpose.msra.mxu0 %v607
        %649 = vmatprep.subr.bf16.mxu0 0
        %650 = vmatpush1.bf16.xpose.msra.mxu0 %v608
        %651 = vmatprep.subr.bf16.mxu0 0
        %652 = vmatpush1.bf16.xpose.msra.mxu0 %v609
        %653 = vmatprep.subr.bf16.mxu0 0
        %654 = vmatpush1.bf16.xpose.msra.mxu0 %v610
        %655 = vmatprep.subr.bf16.mxu0 0
        %656 = vmatpush1.bf16.xpose.msra.mxu0 %v611
        %657 = vmatprep.subr.bf16.mxu0 0
        %658 = vmatpush1.bf16.xpose.msra.mxu0 %v612
        %659 = vmatprep.subr.bf16.mxu0 0
        %660 = vmatpush1.bf16.xpose.msra.mxu0 %v613
        %661 = vmatprep.subr.bf16.mxu0 0
        %662 = vmatpush1.bf16.xpose.msra.mxu0 %v614
        %663 = vmatprep.subr.bf16.mxu0 0
        %664 = vmatpush1.bf16.xpose.msra.mxu0 %v615
        %665 = vmatprep.subr.bf16.mxu0 0
        %666 = vmatpush1.bf16.xpose.msra.mxu0 %v616
        %667 = vmatprep.subr.bf16.mxu0 0
        %668 = vmatpush1.bf16.xpose.msra.mxu0 %v617
        %669 = vmatprep.subr.bf16.mxu0 0
        %670 = vmatpush1.bf16.xpose.msra.mxu0 %v618
        %671 = vmatprep.subr.bf16.mxu0 0
        %672 = vmatpush1.bf16.xpose.msra.mxu0 %v619
        %673 = vmatprep.subr.bf16.mxu0 0
        %674 = vmatpush1.bf16.xpose.msra.mxu0 %v620
        %675 = vmatprep.subr.bf16.mxu0 0
        %676 = vmatpush1.bf16.xpose.msra.mxu0 %v621
        %677 = vmatprep.subr.bf16.mxu0 0
        %678 = vmatpush1.bf16.xpose.msra.mxu0 %v622
        %679 = vmatprep.mubr.bf16.mxu0 0
        %680 = vmatmul.mubr.bf16.gmra.mrb[0].mxu0 %v639
        %v681 = vpop.f32.mrb[0].mxu0
        %v682 = vadd.f32 0.0, %v681
        %v683 = vpop.f32.mrb[0].mxu0
        %v684 = vadd.f32 0.0, %v683
        %v685 = vpop.f32.mrb[0].mxu0
        %v686 = vadd.f32 0.0, %v685
        %v687 = vpop.f32.mrb[0].mxu0
        %v688 = vadd.f32 0.0, %v687
        %689 = vmatprep.mubr.bf16.mxu0 0
        %690 = vmatmul.mubr.bf16.gmra.mrb[0].mxu0 %v640
        %v691 = vpop.f32.mrb[0].mxu0
        %v692 = vadd.f32 0.0, %v691
        %v693 = vpop.f32.mrb[0].mxu0
        %v694 = vadd.f32 0.0, %v693
        %v695 = vpop.f32.mrb[0].mxu0
        %v696 = vadd.f32 0.0, %v695
        %v697 = vpop.f32.mrb[0].mxu0
        %v698 = vadd.f32 0.0, %v697
        %699 = vmatprep.mubr.bf16.mxu0 0
        %700 = vmatmul.mubr.bf16.gmra.mrb[0].mxu0 %v641
        %v701 = vpop.f32.mrb[0].mxu0
        %v702 = vadd.f32 0.0, %v701
        %v703 = vpop.f32.mrb[0].mxu0
        %v704 = vadd.f32 0.0, %v703
        %v705 = vpop.f32.mrb[0].mxu0
        %v706 = vadd.f32 0.0, %v705
        %v707 = vpop.f32.mrb[0].mxu0
        %v708 = vadd.f32 0.0, %v707
        %709 = vmatprep.mubr.bf16.mxu0 0
        %710 = vmatmul.mubr.bf16.gmra.mrb[0].mxu0 %v642
        %v711 = vpop.f32.mrb[0].mxu0
        %v712 = vadd.f32 0.0, %v711
        %v713 = vpop.f32.mrb[0].mxu0
        %v714 = vadd.f32 0.0, %v713
        %v715 = vpop.f32.mrb[0].mxu0
        %v716 = vadd.f32 0.0, %v715
        %v717 = vpop.f32.mrb[0].mxu0
        %v718 = vadd.f32 0.0, %v717
        %719 = vmatprep.mubr.bf16.mxu0 0
        %720 = vmatmul.mubr.bf16.gmra.mrb[0].mxu0 %v643
        %v721 = vpop.f32.mrb[0].mxu0
        %v722 = vadd.f32 0.0, %v721
        %v723 = vpop.f32.mrb[0].mxu0
        %v724 = vadd.f32 0.0, %v723
        %v725 = vpop.f32.mrb[0].mxu0
        %v726 = vadd.f32 0.0, %v725
        %v727 = vpop.f32.mrb[0].mxu0
        %v728 = vadd.f32 0.0, %v727
        %729 = vmatprep.mubr.bf16.mxu0 0
        %730 = vmatmul.mubr.bf16.gmra.mrb[0].mxu0 %v644
        %v731 = vpop.f32.mrb[0].mxu0
        %v732 = vadd.f32 0.0, %v731
        %v733 = vpop.f32.mrb[0].mxu0
        %v734 = vadd.f32 0.0, %v733
        %v735 = vpop.f32.mrb[0].mxu0
        %v736 = vadd.f32 0.0, %v735
        %v737 = vpop.f32.mrb[0].mxu0
        %v738 = vadd.f32 0.0, %v737
        %739 = vmatprep.mubr.bf16.mxu0 0
        %740 = vmatmul.mubr.bf16.gmra.mrb[0].mxu0 %v645
        %v741 = vpop.f32.mrb[0].mxu0
        %v742 = vadd.f32 0.0, %v741
        %v743 = vpop.f32.mrb[0].mxu0
        %v744 = vadd.f32 0.0, %v743
        %v745 = vpop.f32.mrb[0].mxu0
        %v746 = vadd.f32 0.0, %v745
        %v747 = vpop.f32.mrb[0].mxu0
        %v748 = vadd.f32 0.0, %v747
        %749 = vmatprep.mubr.bf16.mxu0 0
        %750 = vmatmul.mubr.bf16.gmra.mrb[0].mxu0 %v646
        %v751 = vpop.f32.mrb[0].mxu0
        %v752 = vadd.f32 0.0, %v751
        %v753 = vpop.f32.mrb[0].mxu0
        %v754 = vadd.f32 0.0, %v753
        %v755 = vpop.f32.mrb[0].mxu0
        %v756 = vadd.f32 0.0, %v755
        %v757 = vpop.f32.mrb[0].mxu0
        %v758 = vadd.f32 0.0, %v757
        %759 = vdwg.mxu0
        %v760 = vmul.f32 %v682, 0.17677669
        %v761 = vmul.f32 %v684, 0.17677669
        %v762 = vmul.f32 %v686, 0.17677669
        %v763 = vmul.f32 %v688, 0.17677669
        %v764 = vmul.f32 %v692, 0.17677669
        %v765 = vmul.f32 %v694, 0.17677669
        %v766 = vmul.f32 %v696, 0.17677669
        %v767 = vmul.f32 %v698, 0.17677669
        %v768 = vmul.f32 %v702, 0.17677669
        %v769 = vmul.f32 %v704, 0.17677669
        %v770 = vmul.f32 %v706, 0.17677669
        %v771 = vmul.f32 %v708, 0.17677669
        %v772 = vmul.f32 %v712, 0.17677669
        %v773 = vmul.f32 %v714, 0.17677669
        %v774 = vmul.f32 %v716, 0.17677669
        %v775 = vmul.f32 %v718, 0.17677669
        %v776 = vmul.f32 %v722, 0.17677669
        %v777 = vmul.f32 %v724, 0.17677669
        %v778 = vmul.f32 %v726, 0.17677669
        %v779 = vmul.f32 %v728, 0.17677669
        %v780 = vmul.f32 %v732, 0.17677669
        %v781 = vmul.f32 %v734, 0.17677669
        %v782 = vmul.f32 %v736, 0.17677669
        %v783 = vmul.f32 %v738, 0.17677669
        %v784 = vmul.f32 %v742, 0.17677669
        %v785 = vmul.f32 %v744, 0.17677669
        %v786 = vmul.f32 %v746, 0.17677669
        %v787 = vmul.f32 %v748, 0.17677669
        %v788 = vmul.f32 %v752, 0.17677669
        %v789 = vmul.f32 %v754, 0.17677669
        %v790 = vmul.f32 %v756, 0.17677669
        %v791 = vmul.f32 %v758, 0.17677669
        %v792 = vmax.f32 %v760, %v761
        %793 = vmax.xlane.f32.xlu0 %v792
        %v794 = vpop.xlane.xlu0 %793
        %v795 = vmax.f32 %v762, %v763
        %796 = vmax.xlane.f32.xlu0 %v795
        %v797 = vpop.xlane.xlu0 %796
        %v798 = vmax.f32 %v764, %v765
        %799 = vmax.xlane.f32.xlu0 %v798
        %v800 = vpop.xlane.xlu0 %799
        %v801 = vmax.f32 %v766, %v767
        %802 = vmax.xlane.f32.xlu0 %v801
        %v803 = vpop.xlane.xlu0 %802
        %v804 = vmax.f32 %v768, %v769
        %805 = vmax.xlane.f32.xlu0 %v804
        %v806 = vpop.xlane.xlu0 %805
        %v807 = vmax.f32 %v770, %v771
        %808 = vmax.xlane.f32.xlu0 %v807
        %v809 = vpop.xlane.xlu0 %808
        %v810 = vmax.f32 %v772, %v773
        %811 = vmax.xlane.f32.xlu0 %v810
        %v812 = vpop.xlane.xlu0 %811
        %v813 = vmax.f32 %v774, %v775
        %814 = vmax.xlane.f32.xlu0 %v813
        %v815 = vpop.xlane.xlu0 %814
        %v816 = vmax.f32 %v776, %v777
        %817 = vmax.xlane.f32.xlu0 %v816
        %v818 = vpop.xlane.xlu0 %817
        %v819 = vmax.f32 %v778, %v779
        %820 = vmax.xlane.f32.xlu0 %v819
        %v821 = vpop.xlane.xlu0 %820
        %v822 = vmax.f32 %v780, %v781
        %823 = vmax.xlane.f32.xlu0 %v822
        %v824 = vpop.xlane.xlu0 %823
        %v825 = vmax.f32 %v782, %v783
        %826 = vmax.xlane.f32.xlu0 %v825
        %v827 = vpop.xlane.xlu0 %826
        %v828 = vmax.f32 %v784, %v785
        %829 = vmax.xlane.f32.xlu0 %v828
        %v830 = vpop.xlane.xlu0 %829
        %v831 = vmax.f32 %v786, %v787
        %832 = vmax.xlane.f32.xlu0 %v831
        %v833 = vpop.xlane.xlu0 %832
        %v834 = vmax.f32 %v788, %v789
        %835 = vmax.xlane.f32.xlu0 %v834
        %v836 = vpop.xlane.xlu0 %835
        %v837 = vmax.f32 %v790, %v791
        %838 = vmax.xlane.f32.xlu0 %v837
        %v839 = vpop.xlane.xlu0 %838
        %v840 = vsub.f32 %v760, %v794
        %v841 = vsub.f32 %v761, %v794
        %v842 = vsub.f32 %v762, %v797
        %v843 = vsub.f32 %v763, %v797
        %v844 = vsub.f32 %v764, %v800
        %v845 = vsub.f32 %v765, %v800
        %v846 = vsub.f32 %v766, %v803
        %v847 = vsub.f32 %v767, %v803
        %v848 = vsub.f32 %v768, %v806
        %v849 = vsub.f32 %v769, %v806
        %v850 = vsub.f32 %v770, %v809
        %v851 = vsub.f32 %v771, %v809
        %v852 = vsub.f32 %v772, %v812
        %v853 = vsub.f32 %v773, %v812
        %v854 = vsub.f32 %v774, %v815
        %v855 = vsub.f32 %v775, %v815
        %v856 = vsub.f32 %v776, %v818
        %v857 = vsub.f32 %v777, %v818
        %v858 = vsub.f32 %v778, %v821
        %v859 = vsub.f32 %v779, %v821
        %v860 = vsub.f32 %v780, %v824
        %v861 = vsub.f32 %v781, %v824
        %v862 = vsub.f32 %v782, %v827
        %v863 = vsub.f32 %v783, %v827
        %v864 = vsub.f32 %v784, %v830
        %v865 = vsub.f32 %v785, %v830
        %v866 = vsub.f32 %v786, %v833
        %v867 = vsub.f32 %v787, %v833
        %v868 = vsub.f32 %v788, %v836
        %v869 = vsub.f32 %v789, %v836
        %v870 = vsub.f32 %v790, %v839
        %v871 = vsub.f32 %v791, %v839
        %v872 = vmul.f32 %v840, 1.442695
        %v873 = vpow.pop %v872
        %v874 = vmul.f32 %v841, 1.442695
        %v875 = vpow.pop %v874
        %v876 = vmul.f32 %v842, 1.442695
        %v877 = vpow.pop %v876
        %v878 = vmul.f32 %v843, 1.442695
        %v879 = vpow.pop %v878
        %v880 = vmul.f32 %v844, 1.442695
        %v881 = vpow.pop %v880
        %v882 = vmul.f32 %v845, 1.442695
        %v883 = vpow.pop %v882
        %v884 = vmul.f32 %v846, 1.442695
        %v885 = vpow.pop %v884
        %v886 = vmul.f32 %v847, 1.442695
        %v887 = vpow.pop %v886
        %v888 = vmul.f32 %v848, 1.442695
        %v889 = vpow.pop %v888
        %v890 = vmul.f32 %v849, 1.442695
        %v891 = vpow.pop %v890
        %v892 = vmul.f32 %v850, 1.442695
        %v893 = vpow.pop %v892
        %v894 = vmul.f32 %v851, 1.442695
        %v895 = vpow.pop %v894
        %v896 = vmul.f32 %v852, 1.442695
        %v897 = vpow.pop %v896
        %v898 = vmul.f32 %v853, 1.442695
        %v899 = vpow.pop %v898
        %v900 = vmul.f32 %v854, 1.442695
        %v901 = vpow.pop %v900
        %v902 = vmul.f32 %v855, 1.442695
        %v903 = vpow.pop %v902
        %v904 = vmul.f32 %v856, 1.442695
        %v905 = vpow.pop %v904
        %v906 = vmul.f32 %v857, 1.442695
        %v907 = vpow.pop %v906
        %v908 = vmul.f32 %v858, 1.442695
        %v909 = vpow.pop %v908
        %v910 = vmul.f32 %v859, 1.442695
        %v911 = vpow.pop %v910
        %v912 = vmul.f32 %v860, 1.442695
        %v913 = vpow.pop %v912
        %v914 = vmul.f32 %v861, 1.442695
        %v915 = vpow.pop %v914
        %v916 = vmul.f32 %v862, 1.442695
        %v917 = vpow.pop %v916
        %v918 = vmul.f32 %v863, 1.442695
        %v919 = vpow.pop %v918
        %v920 = vmul.f32 %v864, 1.442695
        %v921 = vpow.pop %v920
        %v922 = vmul.f32 %v865, 1.442695
        %v923 = vpow.pop %v922
        %v924 = vmul.f32 %v866, 1.442695
        %v925 = vpow.pop %v924
        %v926 = vmul.f32 %v867, 1.442695
        %v927 = vpow.pop %v926
        %v928 = vmul.f32 %v868, 1.442695
        %v929 = vpow.pop %v928
        %v930 = vmul.f32 %v869, 1.442695
        %v931 = vpow.pop %v930
        %v932 = vmul.f32 %v870, 1.442695
        %v933 = vpow.pop %v932
        %v934 = vmul.f32 %v871, 1.442695
        %v935 = vpow.pop %v934
        %v936 = vadd.f32 %v873, %v875
        %937 = vadd.xlane.f32.xlu0 %v936
        %v938 = vpop.xlane.xlu0 %937
        %v939 = vadd.f32 %v877, %v879
        %940 = vadd.xlane.f32.xlu0 %v939
        %v941 = vpop.xlane.xlu0 %940
        %v942 = vadd.f32 %v881, %v883
        %943 = vadd.xlane.f32.xlu0 %v942
        %v944 = vpop.xlane.xlu0 %943
        %v945 = vadd.f32 %v885, %v887
        %946 = vadd.xlane.f32.xlu0 %v945
        %v947 = vpop.xlane.xlu0 %946
        %v948 = vadd.f32 %v889, %v891
        %949 = vadd.xlane.f32.xlu0 %v948
        %v950 = vpop.xlane.xlu0 %949
        %v951 = vadd.f32 %v893, %v895
        %952 = vadd.xlane.f32.xlu0 %v951
        %v953 = vpop.xlane.xlu0 %952
        %v954 = vadd.f32 %v897, %v899
        %955 = vadd.xlane.f32.xlu0 %v954
        %v956 = vpop.xlane.xlu0 %955
        %v957 = vadd.f32 %v901, %v903
        %958 = vadd.xlane.f32.xlu0 %v957
        %v959 = vpop.xlane.xlu0 %958
        %v960 = vadd.f32 %v905, %v907
        %961 = vadd.xlane.f32.xlu0 %v960
        %v962 = vpop.xlane.xlu0 %961
        %v963 = vadd.f32 %v909, %v911
        %964 = vadd.xlane.f32.xlu0 %v963
        %v965 = vpop.xlane.xlu0 %964
        %v966 = vadd.f32 %v913, %v915
        %967 = vadd.xlane.f32.xlu0 %v966
        %v968 = vpop.xlane.xlu0 %967
        %v969 = vadd.f32 %v917, %v919
        %970 = vadd.xlane.f32.xlu0 %v969
        %v971 = vpop.xlane.xlu0 %970
        %v972 = vadd.f32 %v921, %v923
        %973 = vadd.xlane.f32.xlu0 %v972
        %v974 = vpop.xlane.xlu0 %973
        %v975 = vadd.f32 %v925, %v927
        %976 = vadd.xlane.f32.xlu0 %v975
        %v977 = vpop.xlane.xlu0 %976
        %v978 = vadd.f32 %v929, %v931
        %979 = vadd.xlane.f32.xlu0 %v978
        %v980 = vpop.xlane.xlu0 %979
        %v981 = vadd.f32 %v933, %v935
        %982 = vadd.xlane.f32.xlu0 %v981
        %v983 = vpop.xlane.xlu0 %982
        %v984 = vrcp.pop %v938
        %v985 = vrcp.pop %v941
        %v986 = vrcp.pop %v944
        %v987 = vrcp.pop %v947
        %v988 = vrcp.pop %v950
        %v989 = vrcp.pop %v953
        %v990 = vrcp.pop %v956
        %v991 = vrcp.pop %v959
        %v992 = vrcp.pop %v962
        %v993 = vrcp.pop %v965
        %v994 = vrcp.pop %v968
        %v995 = vrcp.pop %v971
        %v996 = vrcp.pop %v974
        %v997 = vrcp.pop %v977
        %v998 = vrcp.pop %v980
        %v999 = vrcp.pop %v983
        %v1000 = vmul.f32 %v873, %v984
        %v1001 = vmul.f32 %v875, %v984
        %v1002 = vmul.f32 %v877, %v985
        %v1003 = vmul.f32 %v879, %v985
        %v1004 = vmul.f32 %v881, %v986
        %v1005 = vmul.f32 %v883, %v986
        %v1006 = vmul.f32 %v885, %v987
        %v1007 = vmul.f32 %v887, %v987
        %v1008 = vmul.f32 %v889, %v988
        %v1009 = vmul.f32 %v891, %v988
        %v1010 = vmul.f32 %v893, %v989
        %v1011 = vmul.f32 %v895, %v989
        %v1012 = vmul.f32 %v897, %v990
        %v1013 = vmul.f32 %v899, %v990
        %v1014 = vmul.f32 %v901, %v991
        %v1015 = vmul.f32 %v903, %v991
        %v1016 = vmul.f32 %v905, %v992
        %v1017 = vmul.f32 %v907, %v992
        %v1018 = vmul.f32 %v909, %v993
        %v1019 = vmul.f32 %v911, %v993
        %v1020 = vmul.f32 %v913, %v994
        %v1021 = vmul.f32 %v915, %v994
        %v1022 = vmul.f32 %v917, %v995
        %v1023 = vmul.f32 %v919, %v995
        %v1024 = vmul.f32 %v921, %v996
        %v1025 = vmul.f32 %v923, %v996
        %v1026 = vmul.f32 %v925, %v997
        %v1027 = vmul.f32 %v927, %v997
        %v1028 = vmul.f32 %v929, %v998
        %v1029 = vmul.f32 %v931, %v998
        %v1030 = vmul.f32 %v933, %v999
        %v1031 = vmul.f32 %v935, %v999
        %v1032 = vpack.c.bf16 %v1002, %v1000
        %v1033 = vpack.c.bf16 %v1003, %v1001
        %v1034 = vpack.c.bf16 %v1006, %v1004
        %v1035 = vpack.c.bf16 %v1007, %v1005
        %v1036 = vpack.c.bf16 %v1010, %v1008
        %v1037 = vpack.c.bf16 %v1011, %v1009
        %v1038 = vpack.c.bf16 %v1014, %v1012
        %v1039 = vpack.c.bf16 %v1015, %v1013
        %v1040 = vpack.c.bf16 %v1018, %v1016
        %v1041 = vpack.c.bf16 %v1019, %v1017
        %v1042 = vpack.c.bf16 %v1022, %v1020
        %v1043 = vpack.c.bf16 %v1023, %v1021
        %v1044 = vpack.c.bf16 %v1026, %v1024
        %v1045 = vpack.c.bf16 %v1027, %v1025
        %v1046 = vpack.c.bf16 %v1030, %v1028
        %v1047 = vpack.c.bf16 %v1031, %v1029
        %1048 = vmatprep.subr.bf16.mxu0 0
        %1049 = vmatpush1.bf16.msra.mxu0 %v607
        %1050 = vmatprep.subr.bf16.mxu0 0
        %1051 = vmatpush1.bf16.msra.mxu0 %v608
        %1052 = vmatprep.subr.bf16.mxu0 0
        %1053 = vmatpush1.bf16.msra.mxu0 %v609
        %1054 = vmatprep.subr.bf16.mxu0 0
        %1055 = vmatpush1.bf16.msra.mxu0 %v610
        %1056 = vmatprep.subr.bf16.mxu0 0
        %1057 = vmatpush1.bf16.msra.mxu0 %v611
        %1058 = vmatprep.subr.bf16.mxu0 0
        %1059 = vmatpush1.bf16.msra.mxu0 %v612
        %1060 = vmatprep.subr.bf16.mxu0 0
        %1061 = vmatpush1.bf16.msra.mxu0 %v613
        %1062 = vmatprep.subr.bf16.mxu0 0
        %1063 = vmatpush1.bf16.msra.mxu0 %v614
        %1064 = vmatprep.subr.bf16.mxu0 0
        %1065 = vmatpush1.bf16.msra.mxu0 %v615
        %1066 = vmatprep.subr.bf16.mxu0 0
        %1067 = vmatpush1.bf16.msra.mxu0 %v616
        %1068 = vmatprep.subr.bf16.mxu0 0
        %1069 = vmatpush1.bf16.msra.mxu0 %v617
        %1070 = vmatprep.subr.bf16.mxu0 0
        %1071 = vmatpush1.bf16.msra.mxu0 %v618
        %1072 = vmatprep.subr.bf16.mxu0 0
        %1073 = vmatpush1.bf16.msra.mxu0 %v619
        %1074 = vmatprep.subr.bf16.mxu0 0
        %1075 = vmatpush1.bf16.msra.mxu0 %v620
        %1076 = vmatprep.subr.bf16.mxu0 0
        %1077 = vmatpush1.bf16.msra.mxu0 %v621
        %1078 = vmatprep.subr.bf16.mxu0 0
        %1079 = vmatpush1.bf16.msra.mxu0 %v622
        %1080 = vmatprep.mubr.bf16.mxu0 %v1033
        %1081 = vmatmul.mubr.bf16.gmra.mrb[0].mxu0 %v1032
        %v1082 = vpop.f32.mrb[0].mxu0
        %v1083 = vadd.f32 0.0, %v1082
        %v1084 = vpop.f32.mrb[0].mxu0
        %v1085 = vpop.f32.mrb[0].mxu0
        %v1086 = vadd.f32 0.0, %v1085
        %v1087 = vpop.f32.mrb[0].mxu0
        %1088 = vmatprep.mubr.bf16.mxu0 %v1035
        %1089 = vmatmul.mubr.bf16.gmra.mrb[0].mxu0 %v1034
        %v1090 = vpop.f32.mrb[0].mxu0
        %v1091 = vadd.f32 0.0, %v1090
        %v1092 = vpop.f32.mrb[0].mxu0
        %v1093 = vpop.f32.mrb[0].mxu0
        %v1094 = vadd.f32 0.0, %v1093
        %v1095 = vpop.f32.mrb[0].mxu0
        %1096 = vmatprep.mubr.bf16.mxu0 %v1037
        %1097 = vmatmul.mubr.bf16.gmra.mrb[0].mxu0 %v1036
        %v1098 = vpop.f32.mrb[0].mxu0
        %v1099 = vadd.f32 0.0, %v1098
        %v1100 = vpop.f32.mrb[0].mxu0
        %v1101 = vpop.f32.mrb[0].mxu0
        %v1102 = vadd.f32 0.0, %v1101
        %v1103 = vpop.f32.mrb[0].mxu0
        %1104 = vmatprep.mubr.bf16.mxu0 %v1039
        %1105 = vmatmul.mubr.bf16.gmra.mrb[0].mxu0 %v1038
        %v1106 = vpop.f32.mrb[0].mxu0
        %v1107 = vadd.f32 0.0, %v1106
        %v1108 = vpop.f32.mrb[0].mxu0
        %v1109 = vpop.f32.mrb[0].mxu0
        %v1110 = vadd.f32 0.0, %v1109
        %v1111 = vpop.f32.mrb[0].mxu0
        %1112 = vmatprep.mubr.bf16.mxu0 %v1041
        %1113 = vmatmul.mubr.bf16.gmra.mrb[0].mxu0 %v1040
        %v1114 = vpop.f32.mrb[0].mxu0
        %v1115 = vadd.f32 0.0, %v1114
        %v1116 = vpop.f32.mrb[0].mxu0
        %v1117 = vpop.f32.mrb[0].mxu0
        %v1118 = vadd.f32 0.0, %v1117
        %v1119 = vpop.f32.mrb[0].mxu0
        %1120 = vmatprep.mubr.bf16.mxu0 %v1043
        %1121 = vmatmul.mubr.bf16.gmra.mrb[0].mxu0 %v1042
        %v1122 = vpop.f32.mrb[0].mxu0
        %v1123 = vadd.f32 0.0, %v1122
        %v1124 = vpop.f32.mrb[0].mxu0
        %v1125 = vpop.f32.mrb[0].mxu0
        %v1126 = vadd.f32 0.0, %v1125
        %v1127 = vpop.f32.mrb[0].mxu0
        %1128 = vmatprep.mubr.bf16.mxu0 %v1045
        %1129 = vmatmul.mubr.bf16.gmra.mrb[0].mxu0 %v1044
        %v1130 = vpop.f32.mrb[0].mxu0
        %v1131 = vadd.f32 0.0, %v1130
        %v1132 = vpop.f32.mrb[0].mxu0
        %v1133 = vpop.f32.mrb[0].mxu0
        %v1134 = vadd.f32 0.0, %v1133
        %v1135 = vpop.f32.mrb[0].mxu0
        %1136 = vmatprep.mubr.bf16.mxu0 %v1047
        %1137 = vmatmul.mubr.bf16.gmra.mrb[0].mxu0 %v1046
        %v1138 = vpop.f32.mrb[0].mxu0
        %v1139 = vadd.f32 0.0, %v1138
        %v1140 = vpop.f32.mrb[0].mxu0
        %v1141 = vpop.f32.mrb[0].mxu0
        %v1142 = vadd.f32 0.0, %v1141
        %v1143 = vpop.f32.mrb[0].mxu0
        %1144 = vdwg.mxu0
        %v1145 = vadd.f32 %v623, %v1083
        %v1146 = vadd.f32 %v624, %v1086
        %v1147 = vadd.f32 %v625, %v1091
        %v1148 = vadd.f32 %v626, %v1094
        %v1149 = vadd.f32 %v627, %v1099
        %v1150 = vadd.f32 %v628, %v1102
        %v1151 = vadd.f32 %v629, %v1107
        %v1152 = vadd.f32 %v630, %v1110
        %v1153 = vadd.f32 %v631, %v1115
        %v1154 = vadd.f32 %v632, %v1118
        %v1155 = vadd.f32 %v633, %v1123
        %v1156 = vadd.f32 %v634, %v1126
        %v1157 = vadd.f32 %v635, %v1131
        %v1158 = vadd.f32 %v636, %v1134
        %v1159 = vadd.f32 %v637, %v1139
        %v1160 = vadd.f32 %v638, %v1142
        %v1161 = vld [vmem:[%s5] sm:$0xff]
        %v1162 = vld [vmem:[%s5 + $0x8] sm:$0xff]
        %v1163 = vld [vmem:[%s5 + $0x10] sm:$0xff]
        %v1164 = vld [vmem:[%s5 + $0x18] sm:$0xff]
        %v1165 = vld [vmem:[%s5 + $0x20] sm:$0xff]
        %v1166 = vld [vmem:[%s5 + $0x28] sm:$0xff]
        %v1167 = vld [vmem:[%s5 + $0x30] sm:$0xff]
        %v1168 = vld [vmem:[%s5 + $0x38] sm:$0xff]
        %v1169 = vld [vmem:[%s5 + $0x40] sm:$0xff]
        %v1170 = vld [vmem:[%s5 + $0x48] sm:$0xff]
        %v1171 = vld [vmem:[%s5 + $0x50] sm:$0xff]
        %v1172 = vld [vmem:[%s5 + $0x58] sm:$0xff]
        %v1173 = vld [vmem:[%s5 + $0x60] sm:$0xff]
        %v1174 = vld [vmem:[%s5 + $0x68] sm:$0xff]
        %v1175 = vld [vmem:[%s5 + $0x70] sm:$0xff]
        %v1176 = vld [vmem:[%s5 + $0x78] sm:$0xff]
        %v1177 = vmul.f32 %v1161, %v1145
        %v1178 = vmul.f32 %v1162, %v1146
        %v1179 = vmul.f32 %v1163, %v1147
        %v1180 = vmul.f32 %v1164, %v1148
        %v1181 = vmul.f32 %v1165, %v1149
        %v1182 = vmul.f32 %v1166, %v1150
        %v1183 = vmul.f32 %v1167, %v1151
        %v1184 = vmul.f32 %v1168, %v1152
        %v1185 = vmul.f32 %v1169, %v1153
        %v1186 = vmul.f32 %v1170, %v1154
        %v1187 = vmul.f32 %v1171, %v1155
        %v1188 = vmul.f32 %v1172, %v1156
        %v1189 = vmul.f32 %v1173, %v1157
        %v1190 = vmul.f32 %v1174, %v1158
        %v1191 = vmul.f32 %v1175, %v1159
        %v1192 = vmul.f32 %v1176, %v1160
        %1193 = vadd.xlane.f32.xlu0 %v1177
        %v1194 = vpop.xlane.xlu0 %1193
        %1195 = vadd.xlane.f32.xlu0 %v1178
        %v1196 = vpop.xlane.xlu0 %1195
        %1197 = vadd.xlane.f32.xlu0 %v1179
        %v1198 = vpop.xlane.xlu0 %1197
        %1199 = vadd.xlane.f32.xlu0 %v1180
        %v1200 = vpop.xlane.xlu0 %1199
        %1201 = vadd.xlane.f32.xlu0 %v1181
        %v1202 = vpop.xlane.xlu0 %1201
        %1203 = vadd.xlane.f32.xlu0 %v1182
        %v1204 = vpop.xlane.xlu0 %1203
        %1205 = vadd.xlane.f32.xlu0 %v1183
        %v1206 = vpop.xlane.xlu0 %1205
        %1207 = vadd.xlane.f32.xlu0 %v1184
        %v1208 = vpop.xlane.xlu0 %1207
        %1209 = vadd.xlane.f32.xlu0 %v1185
        %v1210 = vpop.xlane.xlu0 %1209
        %1211 = vadd.xlane.f32.xlu0 %v1186
        %v1212 = vpop.xlane.xlu0 %1211
        %1213 = vadd.xlane.f32.xlu0 %v1187
        %v1214 = vpop.xlane.xlu0 %1213
        %1215 = vadd.xlane.f32.xlu0 %v1188
        %v1216 = vpop.xlane.xlu0 %1215
        %1217 = vadd.xlane.f32.xlu0 %v1189
        %v1218 = vpop.xlane.xlu0 %1217
        %1219 = vadd.xlane.f32.xlu0 %v1190
        %v1220 = vpop.xlane.xlu0 %1219
        %1221 = vadd.xlane.f32.xlu0 %v1191
        %v1222 = vpop.xlane.xlu0 %1221
        %1223 = vadd.xlane.f32.xlu0 %v1192
        %v1224 = vpop.xlane.xlu0 %1223
        %v1225 = vld [vmem:[%s6] sm:$0x1]
        %v1227 = vlaneseq
        %v1228 = vshrl.u32 %v1227, 7
        %v1229 = vsub.s32 0, %v1228
        %v1230 = vrot.slane %v1225, %v1229
        %1232 = vbcast.lane.b32.xlu0 %v1230, 256
        %v1233 = vpop.permute.xlu0 %1232
        %s1235 = sor.u32 256, 8
        %1236 = vbcast.lane.b32.xlu0 %v1230, %s1235
        %v1237 = vpop.permute.xlu0 %1236
        %s1239 = sor.u32 256, 16
        %1240 = vbcast.lane.b32.xlu0 %v1230, %s1239
        %v1241 = vpop.permute.xlu0 %1240
        %s1243 = sor.u32 256, 24
        %1244 = vbcast.lane.b32.xlu0 %v1230, %s1243
        %v1245 = vpop.permute.xlu0 %1244
        %s1247 = sor.u32 256, 32
        %1248 = vbcast.lane.b32.xlu0 %v1230, %s1247
        %v1249 = vpop.permute.xlu0 %1248
        %s1251 = sor.u32 256, 40
        %1252 = vbcast.lane.b32.xlu0 %v1230, %s1251
        %v1253 = vpop.permute.xlu0 %1252
        %s1255 = sor.u32 256, 48
        %1256 = vbcast.lane.b32.xlu0 %v1230, %s1255
        %v1257 = vpop.permute.xlu0 %1256
        %s1259 = sor.u32 256, 56
        %1260 = vbcast.lane.b32.xlu0 %v1230, %s1259
        %v1261 = vpop.permute.xlu0 %1260
        %s1263 = sor.u32 256, 64
        %1264 = vbcast.lane.b32.xlu0 %v1230, %s1263
        %v1265 = vpop.permute.xlu0 %1264
        %s1267 = sor.u32 256, 72
        %1268 = vbcast.lane.b32.xlu0 %v1230, %s1267
        %v1269 = vpop.permute.xlu0 %1268
        %s1271 = sor.u32 256, 80
        %1272 = vbcast.lane.b32.xlu0 %v1230, %s1271
        %v1273 = vpop.permute.xlu0 %1272
        %s1275 = sor.u32 256, 88
        %1276 = vbcast.lane.b32.xlu0 %v1230, %s1275
        %v1277 = vpop.permute.xlu0 %1276
        %s1279 = sor.u32 256, 96
        %1280 = vbcast.lane.b32.xlu0 %v1230, %s1279
        %v1281 = vpop.permute.xlu0 %1280
        %s1283 = sor.u32 256, 104
        %1284 = vbcast.lane.b32.xlu0 %v1230, %s1283
        %v1285 = vpop.permute.xlu0 %1284
        %s1287 = sor.u32 256, 112
        %1288 = vbcast.lane.b32.xlu0 %v1230, %s1287
        %v1289 = vpop.permute.xlu0 %1288
        %s1291 = sor.u32 256, 120
        %1292 = vbcast.lane.b32.xlu0 %v1230, %s1291
        %v1293 = vpop.permute.xlu0 %1292
        %v1310 = vadd.f32 %v1194, %v1233
        %v1311 = vadd.f32 %v1196, %v1237
        %v1312 = vadd.f32 %v1198, %v1241
        %v1313 = vadd.f32 %v1200, %v1245
        %v1314 = vadd.f32 %v1202, %v1249
        %v1315 = vadd.f32 %v1204, %v1253
        %v1316 = vadd.f32 %v1206, %v1257
        %v1317 = vadd.f32 %v1208, %v1261
        %v1318 = vadd.f32 %v1210, %v1265
        %v1319 = vadd.f32 %v1212, %v1269
        %v1320 = vadd.f32 %v1214, %v1273
        %v1321 = vadd.f32 %v1216, %v1277
        %v1322 = vadd.f32 %v1218, %v1281
        %v1323 = vadd.f32 %v1220, %v1285
        %v1324 = vadd.f32 %v1222, %v1289
        %v1325 = vadd.f32 %v1224, %v1293
        %1342 = vset.pattern.permute.xlu0 0
        %1343 = vperm.xlu0 %1342, %v1310
        %v1344 = vpop.permute.xlu0 %1343
        %1345 = vset.pattern.permute.xlu0 0
        %1346 = vperm.xlu0 %1345, %v1311
        %v1347 = vpop.permute.xlu0 %1346
        %1348 = vset.pattern.permute.xlu0 0
        %1349 = vperm.xlu0 %1348, %v1312
        %v1350 = vpop.permute.xlu0 %1349
        %1351 = vset.pattern.permute.xlu0 0
        %1352 = vperm.xlu0 %1351, %v1313
        %v1353 = vpop.permute.xlu0 %1352
        %1354 = vset.pattern.permute.xlu0 0
        %1355 = vperm.xlu0 %1354, %v1314
        %v1356 = vpop.permute.xlu0 %1355
        %1357 = vset.pattern.permute.xlu0 0
        %1358 = vperm.xlu0 %1357, %v1315
        %v1359 = vpop.permute.xlu0 %1358
        %1360 = vset.pattern.permute.xlu0 0
        %1361 = vperm.xlu0 %1360, %v1316
        %v1362 = vpop.permute.xlu0 %1361
        %1363 = vset.pattern.permute.xlu0 0
        %1364 = vperm.xlu0 %1363, %v1317
        %v1365 = vpop.permute.xlu0 %1364
        %1366 = vset.pattern.permute.xlu0 0
        %1367 = vperm.xlu0 %1366, %v1318
        %v1368 = vpop.permute.xlu0 %1367
        %1369 = vset.pattern.permute.xlu0 0
        %1370 = vperm.xlu0 %1369, %v1319
        %v1371 = vpop.permute.xlu0 %1370
        %1372 = vset.pattern.permute.xlu0 0
        %1373 = vperm.xlu0 %1372, %v1320
        %v1374 = vpop.permute.xlu0 %1373
        %1375 = vset.pattern.permute.xlu0 0
        %1376 = vperm.xlu0 %1375, %v1321
        %v1377 = vpop.permute.xlu0 %1376
        %1378 = vset.pattern.permute.xlu0 0
        %1379 = vperm.xlu0 %1378, %v1322
        %v1380 = vpop.permute.xlu0 %1379
        %1381 = vset.pattern.permute.xlu0 0
        %1382 = vperm.xlu0 %1381, %v1323
        %v1383 = vpop.permute.xlu0 %1382
        %1384 = vset.pattern.permute.xlu0 0
        %1385 = vperm.xlu0 %1384, %v1324
        %v1386 = vpop.permute.xlu0 %1385
        %1387 = vset.pattern.permute.xlu0 0
        %1388 = vperm.xlu0 %1387, %v1325
        %v1389 = vpop.permute.xlu0 %1388
        %v1390 = vlaneseq
        %v1391 = vand.u32 %v1390, 127
        %v1392 = vlaneseq
        %v1393 = vshrl.u32 %v1392, 7
        %v1394 = vsub.s32 %v1391, %v1393
        %v1395 = vrot.slane %v1344, %v1394
        %v1396 = vadd.s32 %v1391, 4294967288
        %v1397 = vlaneseq
        %v1398 = vshrl.u32 %v1397, 7
        %v1399 = vsub.s32 %v1396, %v1398
        %v1400 = vrot.slane %v1347, %v1399
        %vm1401 = vcmask 130112
        %v1402 = vsel %vm1401, %v1400, %v1395
        %v1403 = vadd.s32 %v1391, 4294967280
        %v1404 = vlaneseq
        %v1405 = vshrl.u32 %v1404, 7
        %v1406 = vsub.s32 %v1403, %v1405
        %v1407 = vrot.slane %v1350, %v1406
        %vm1408 = vcmask 195712
        %v1409 = vsel %vm1408, %v1407, %v1402
        %v1410 = vadd.s32 %v1391, 4294967272
        %v1411 = vlaneseq
        %v1412 = vshrl.u32 %v1411, 7
        %v1413 = vsub.s32 %v1410, %v1412
        %v1414 = vrot.slane %v1353, %v1413
        %vm1415 = vcmask 261312
        %v1416 = vsel %vm1415, %v1414, %v1409
        %v1417 = vadd.s32 %v1391, 4294967264
        %v1418 = vlaneseq
        %v1419 = vshrl.u32 %v1418, 7
        %v1420 = vsub.s32 %v1417, %v1419
        %v1421 = vrot.slane %v1356, %v1420
        %vm1422 = vcmask 326912
        %v1423 = vsel %vm1422, %v1421, %v1416
        %v1424 = vadd.s32 %v1391, 4294967256
        %v1425 = vlaneseq
        %v1426 = vshrl.u32 %v1425, 7
        %v1427 = vsub.s32 %v1424, %v1426
        %v1428 = vrot.slane %v1359, %v1427
        %vm1429 = vcmask 392512
        %v1430 = vsel %vm1429, %v1428, %v1423
        %v1431 = vadd.s32 %v1391, 4294967248
        %v1432 = vlaneseq
        %v1433 = vshrl.u32 %v1432, 7
        %v1434 = vsub.s32 %v1431, %v1433
        %v1435 = vrot.slane %v1362, %v1434
        %vm1436 = vcmask 458112
        %v1437 = vsel %vm1436, %v1435, %v1430
        %v1438 = vadd.s32 %v1391, 4294967240
        %v1439 = vlaneseq
        %v1440 = vshrl.u32 %v1439, 7
        %v1441 = vsub.s32 %v1438, %v1440
        %v1442 = vrot.slane %v1365, %v1441
        %vm1443 = vcmask 523712
        %v1444 = vsel %vm1443, %v1442, %v1437
        %v1445 = vadd.s32 %v1391, 4294967232
        %v1446 = vlaneseq
        %v1447 = vshrl.u32 %v1446, 7
        %v1448 = vsub.s32 %v1445, %v1447
        %v1449 = vrot.slane %v1368, %v1448
        %vm1450 = vcmask 589312
        %v1451 = vsel %vm1450, %v1449, %v1444
        %v1452 = vadd.s32 %v1391, 4294967224
        %v1453 = vlaneseq
        %v1454 = vshrl.u32 %v1453, 7
        %v1455 = vsub.s32 %v1452, %v1454
        %v1456 = vrot.slane %v1371, %v1455
        %vm1457 = vcmask 654912
        %v1458 = vsel %vm1457, %v1456, %v1451
        %v1459 = vadd.s32 %v1391, 4294967216
        %v1460 = vlaneseq
        %v1461 = vshrl.u32 %v1460, 7
        %v1462 = vsub.s32 %v1459, %v1461
        %v1463 = vrot.slane %v1374, %v1462
        %vm1464 = vcmask 720512
        %v1465 = vsel %vm1464, %v1463, %v1458
        %v1466 = vadd.s32 %v1391, 4294967208
        %v1467 = vlaneseq
        %v1468 = vshrl.u32 %v1467, 7
        %v1469 = vsub.s32 %v1466, %v1468
        %v1470 = vrot.slane %v1377, %v1469
        %vm1471 = vcmask 786112
        %v1472 = vsel %vm1471, %v1470, %v1465
        %v1473 = vadd.s32 %v1391, 4294967200
        %v1474 = vlaneseq
        %v1475 = vshrl.u32 %v1474, 7
        %v1476 = vsub.s32 %v1473, %v1475
        %v1477 = vrot.slane %v1380, %v1476
        %vm1478 = vcmask 851712
        %v1479 = vsel %vm1478, %v1477, %v1472
        %v1480 = vadd.s32 %v1391, 4294967192
        %v1481 = vlaneseq
        %v1482 = vshrl.u32 %v1481, 7
        %v1483 = vsub.s32 %v1480, %v1482
        %v1484 = vrot.slane %v1383, %v1483
        %vm1485 = vcmask 917312
        %v1486 = vsel %vm1485, %v1484, %v1479
        %v1487 = vadd.s32 %v1391, 4294967184
        %v1488 = vlaneseq
        %v1489 = vshrl.u32 %v1488, 7
        %v1490 = vsub.s32 %v1487, %v1489
        %v1491 = vrot.slane %v1386, %v1490
        %vm1492 = vcmask 982912
        %v1493 = vsel %vm1492, %v1491, %v1486
        %v1494 = vadd.s32 %v1391, 4294967176
        %v1495 = vlaneseq
        %v1496 = vshrl.u32 %v1495, 7
        %v1497 = vsub.s32 %v1494, %v1496
        %v1498 = vrot.slane %v1389, %v1497
        %vm1499 = vcmask 1048512
        %v1500 = vsel %vm1499, %v1498, %v1493
        %1502 = vst [vmem:[%s270] sm:$0x1] %v1500
        %s1503 = sand.u32 %s181, 1
        %s1504 = scalar_lea.sflag [#allocation3], %s1503
        %s1505 = sand.u32 %s181, 1
        %s1506 = scalar_lea.vmem [#allocation2], %s1505
        // Predicated region
        $region49: #{query2label_forward.1} parent=47 // pred_check
          %p1507 = pneg %p191
        $region50: #{query2label_forward.1} parent=47 // pred_check_branch
          %1509 = sbr.rel (%p1507) target = $region52
        $region51: #{query2label_forward.1} parent=47 // pred_region
          %s1511 = ssub.s32 16, 16
          %1512 = vsyncadd %s1504, %s1511
          %s1513 = smul.addr %s21, 16
          %s1514 = scalar_lea.hbm %s7, %s1513
          %s1516 = sshll.u32 %s1506, 4
          %s1517 = int_to_ptr.vmem [resolvable:$true] %s1516
          %1519 = dma.vmem_to_hbm [thread:$0]  %s1517, 16, %s1514, %s1504
        $region52: #{query2label_forward.1} parent=47 // pred_fallthru
          _
      $region48: #{query2label_forward.1} parent=5 // pred_fallthru
        _
      %p1520 = scmp.le.s32.totalorder 2, %s16
      // Predicated region
      $region53: #{query2label_forward.1} parent=5 // pred_check
        %p1521 = pneg %p1520
      $region54: #{query2label_forward.1} parent=5 // pred_check_branch
        %1523 = sbr.rel (%p1521) target = $region56
      $region55: #{query2label_forward.1} parent=5 // pred_region
        %s1524 = ssub.s32 %s16, 2
        // Predicated region
        $region57: #{query2label_forward.1} parent=55 // pred_check
          %p1525 = pneg %p197
        $region58: #{query2label_forward.1} parent=55 // pred_check_branch
          %1527 = sbr.rel (%p1525) target = $region60
        $region59: #{query2label_forward.1} parent=55 // pred_region
          %s1528 = sand.u32 %s182, 1
          %s1529 = scalar_lea.sflag [#allocation3], %s1528
          %s1530 = sand.u32 %s182, 1
          %s1531 = scalar_lea.vmem [#allocation2], %s1530
          %1532 = dma.done %s1529, 16
        $region60: #{query2label_forward.1} parent=55 // pred_fallthru
          _
      $region56: #{query2label_forward.1} parent=5 // pred_fallthru
        _
    $region6: #{query2label_forward.1} parent=1 // loop_footer
      %s20 = sadd.s32 1, %s16
    $region7: #{query2label_forward.1} parent=1 // loop_footer_branch
      %15 = sbr.rel target = $region3
    $region8: #{query2label_forward.1} parent=1 // loop_exit
      _
    %1533 = vsyncpa [#allocation3], 1
    %s1534 = scalar_lea.sflag [#allocation3], 1
    %1535 = vsyncpa %s1534, 1

</llo_original>
